<compile_context>
chip_gen: v5e
topology: v5e:2x2
jax: 0.10.0
libtpu: 0.0.40
codegen_flags: <defaults>
</compile_context>

<pallas_src>
import jax
import jax.numpy as jnp
import numpy as np
from jax.experimental import pallas as pl
from jax.experimental.pallas import tpu as pltpu

EPS = 1e-5
EXPANSION = 4


def bottleneck_kernel(x_ref, w1_ref, s1_ref, t1_ref,
                      w2_ref, s2_ref, t2_ref,
                      w3_ref, s3_ref, t3_ref,
                      out_ref, pad_ref, acc_ref):
    Hp2, Wp2, C1 = pad_ref.shape
    H, W = Hp2 - 2, Wp2 - 2
    HW = H * W

    # Zero only the 1-pixel halo of the padded staging buffer (bf16).  Done
    # every grid step so correctness does not depend on which core executes
    # which batch index under "parallel" megacore sharding; the interior is
    # fully rewritten below each step.
    zrow = jnp.zeros((1, W + 2, C1), jnp.bfloat16)
    zcol = jnp.zeros((H + 2, 1, C1), jnp.bfloat16)
    pad_ref[0:1, :, :] = zrow
    pad_ref[H + 1:H + 2, :, :] = zrow
    pad_ref[:, 0:1, :] = zcol
    pad_ref[:, W + 1:W + 2, :] = zcol

    x_bf = x_ref[0]                                       # (HW, Cin) bf16

    # conv1 (1x1) + folded BN1 + ReLU  (bf16 MXU operands, f32 accum/epilogue)
    h1 = jnp.maximum(
        jnp.dot(x_bf, w1_ref[...], preferred_element_type=jnp.float32)
        * s1_ref[...] + t1_ref[...], 0.0)                 # (HW, C1) f32
    pad_ref[1:H + 1, 1:W + 1, :] = h1.reshape(H, W, C1).astype(jnp.bfloat16)

    # conv2 (3x3, stride=1, padding=1): 9 accumulating MXU matmuls over shifted
    # windows of the padded bf16 buffer (no im2col staging buffer).
    for tap in range(9):
        dy, dx = tap // 3, tap % 3
        win = pad_ref[dy:dy + H, dx:dx + W, :].reshape(HW, C1)        # bf16
        part = jnp.dot(win, w2_ref[tap], preferred_element_type=jnp.float32)
        if tap == 0:
            acc_ref[...] = part
        else:
            acc_ref[...] += part

    h2 = jnp.maximum(acc_ref[...] * s2_ref[...] + t2_ref[...], 0.0)   # f32

    # conv3 (1x1) + folded BN3
    h3 = (jnp.dot(h2.astype(jnp.bfloat16), w3_ref[...],
                  preferred_element_type=jnp.float32)
          * s3_ref[...] + t3_ref[...])                     # (HW, C3) f32

    # identity residual add + ReLU (dim_change is None, Cin == C3); f32 math,
    # single downcast on the way out.
    out_ref[0] = jnp.maximum(h3 + x_bf.astype(jnp.float32),
                             0.0).astype(jnp.bfloat16)


def bottleneck_forward(x_nhwc, kparams):
    """x_nhwc: (N, H, W, Cin) bfloat16, NHWC.  Returns (N, H, W, C3) bfloat16."""
    N, H, W, Cin = x_nhwc.shape
    w1, s1, t1, w2, s2, t2, w3, s3, t3 = kparams
    C1 = w1.shape[1]
    C3 = w3.shape[1]
    assert Cin == C3, "identity residual requires input_planes == planes * 4"
    HW = H * W

    # Lane-dense 2-D activation blocks: flatten spatial in the wrapper (free,
    # contiguous reshape at the XLA level).
    x2 = x_nhwc.reshape(N, HW, Cin)

    def full(shape):
        return pl.BlockSpec(shape, lambda n, _r=len(shape): (0,) * _r)

    grid_spec = pltpu.PrefetchScalarGridSpec(
        num_scalar_prefetch=0,
        grid=(N,),
        in_specs=[
            pl.BlockSpec((1, HW, Cin), lambda n: (n, 0, 0)),
            full(w1.shape), full(s1.shape), full(t1.shape),
            full(w2.shape), full(s2.shape), full(t2.shape),
            full(w3.shape), full(s3.shape), full(t3.shape),
        ],
        out_specs=pl.BlockSpec((1, HW, C3), lambda n: (n, 0, 0)),
        scratch_shapes=[
            pltpu.VMEM((H + 2, W + 2, C1), jnp.bfloat16),   # zero-padded h1
            pltpu.VMEM((HW, C1), jnp.float32),              # conv2 f32 accumulator
        ],
    )
    out2 = pl.pallas_call(
        bottleneck_kernel,
        out_shape=jax.ShapeDtypeStruct((N, HW, C3), jnp.bfloat16),
        grid_spec=grid_spec,
        compiler_params=pltpu.CompilerParams(
            # batch axis is fully independent -> shard across TensorCores on
            # multi-core chips; no-op on single-TC v5e/v6e.
            dimension_semantics=("parallel",),
            vmem_limit_bytes=48 * 1024 * 1024,
        ),
    )(x2, w1, s1, t1, w2, s2, t2, w3, s3, t3)
    return out2.reshape(N, H, W, C3)


# ---------------- parameter setup (deterministic, PyTorch-shaped) -------------

def init_params(key, input_planes, planes):
    C3 = planes * EXPANSION
    keys = jax.random.split(key, 9)

    def rnd(k, shape, scale=0.1):
        return scale * jax.random.normal(k, shape, jnp.float32)

    def bn_params(k, c):
        ks = jax.random.split(k, 4)
        gamma = 1.0 + 0.1 * jax.random.normal(ks[0], (c,), jnp.float32)
        beta = 0.1 * jax.random.normal(ks[1], (c,), jnp.float32)
        mean = 0.1 * jax.random.normal(ks[2], (c,), jnp.float32)
        var = jnp.abs(jax.random.normal(ks[3], (c,), jnp.float32)) + 0.5
        return gamma, beta, mean, var

    return dict(
        w1=rnd(keys[0], (planes, input_planes, 1, 1)), b1=rnd(keys[1], (planes,)),
        w2=rnd(keys[2], (planes, planes, 3, 3)),       b2=rnd(keys[3], (planes,)),
        w3=rnd(keys[4], (C3, planes, 1, 1)),           b3=rnd(keys[5], (C3,)),
        bn1=bn_params(keys[6], planes),
        bn2=bn_params(keys[7], planes),
        bn3=bn_params(keys[8], C3),
    )


def fold_bn(bias, gamma, beta, mean, var):
    scale = gamma / jnp.sqrt(var + EPS)
    shift = (bias - mean) * scale + beta
    return scale.reshape(1, -1), shift.reshape(1, -1)      # broadcast over (H*W, C)


def kernel_params(p):
    # PyTorch OIHW conv weights -> matmul form (channels-last), bf16 for the MXU.
    w1 = jnp.transpose(p['w1'][:, :, 0, 0]).astype(jnp.bfloat16)        # (Cin, C1)
    w3 = jnp.transpose(p['w3'][:, :, 0, 0]).astype(jnp.bfloat16)        # (C1, C3)
    co, ci = p['w2'].shape[0], p['w2'].shape[1]
    # (co,ci,ky,kx) -> (ky,kx,ci,co) -> (9, ci, co); tap index = ky*3 + kx
    # matches the shifted-window (dy,dx) ordering in the kernel.
    w2 = jnp.transpose(p['w2'], (2, 3, 1, 0)).reshape(9, ci, co).astype(jnp.bfloat16)
    s1, t1 = fold_bn(p['b1'], *p['bn1'])
    s2, t2 = fold_bn(p['b2'], *p['bn2'])
    s3, t3 = fold_bn(p['b3'], *p['bn3'])
    return (w1, s1, t1, w2, s2, t2, w3, s3, t3)


# ---------------- pure-JAX reference (eval-mode BN), for verification ---------

def ref_bottleneck(x, p):
    def bn(y, gamma, beta, mean, var):
        return (y - mean) / jnp.sqrt(var + EPS) * gamma + beta

    def conv(a, w_oihw, b, pad):
        w = jnp.transpose(w_oihw, (2, 3, 1, 0))  # HWIO
        y = jax.lax.conv_general_dilated(
            a, w, window_strides=(1, 1),
            padding=[(pad, pad), (pad, pad)],
            dimension_numbers=('NHWC', 'HWIO', 'NHWC'))
        return y + b

    res = x
    out = jax.nn.relu(bn(conv(x, p['w1'], p['b1'], 0), *p['bn1']))
    out = jax.nn.relu(bn(conv(out, p['w2'], p['b2'], 1), *p['bn2']))
    out = bn(conv(out, p['w3'], p['b3'], 0), *p['bn3'])
    return jax.nn.relu(out + res)


if __name__ == "__main__":
    # small config: input_planes = planes * expansion so the identity residual matches
    N, H, W = 2, 8, 8
    planes = 4
    Cin = planes * EXPANSION  # 16

    key = jax.random.PRNGKey(0)
    kx, kp = jax.random.split(key)
    x_f32 = jax.random.normal(kx, (N, H, W, Cin), jnp.float32)   # NHWC (NCHW equiv: (2,16,8,8))
    params = init_params(kp, Cin, planes)

    x_bf16 = x_f32.astype(jnp.bfloat16)                  # bf16 activation I/O
    out = bottleneck_forward(x_bf16, kernel_params(params))
    out = jax.block_until_ready(out)

    # Reference on the bf16-rounded input (the kernel's actual input), all f32 math.
    ref = ref_bottleneck(x_bf16.astype(jnp.float32), params)
    assert out.shape == (N, H, W, planes * EXPANSION)
    # bf16 matmul operands + bf16 output with f32 accumulation -> loosened tolerance
    np.testing.assert_allclose(np.asarray(out.astype(jnp.float32)),
                               np.asarray(ref), atol=3e-2, rtol=3e-2)
    print("KERNEL_OK")
</pallas_src>

<mosaic_0001>
module attributes {stable_mosaic.version = 11 : i64} {
  func.func @bottleneck_kernel(%arg0: i32, %arg1: memref<1x64x16xbf16, #tpu.memory_space<vmem>>, %arg2: memref<16x4xbf16, #tpu.memory_space<vmem>>, %arg3: memref<1x4xf32, #tpu.memory_space<vmem>>, %arg4: memref<1x4xf32, #tpu.memory_space<vmem>>, %arg5: memref<9x4x4xbf16, #tpu.memory_space<vmem>>, %arg6: memref<1x4xf32, #tpu.memory_space<vmem>>, %arg7: memref<1x4xf32, #tpu.memory_space<vmem>>, %arg8: memref<4x16xbf16, #tpu.memory_space<vmem>>, %arg9: memref<1x16xf32, #tpu.memory_space<vmem>>, %arg10: memref<1x16xf32, #tpu.memory_space<vmem>>, %arg11: memref<1x64x16xbf16, #tpu.memory_space<vmem>>, %arg12: memref<10x10x4xbf16, #tpu.memory_space<vmem>>, %arg13: memref<64x4xf32, #tpu.memory_space<vmem>>) attributes {dimension_semantics = [#tpu.dimension_semantics<parallel>], iteration_bounds = array<i64: 2>, scalar_prefetch = 0 : i64, scratch_operands = 2 : i64, tpu.core_type = #tpu.core_type<tc>, window_params = [{transform_indices = @transform_0, window_bounds = array<i64: 1, 64, 16>}, {pipeline_mode = #tpu.pipeline_mode<synchronous>, transform_indices = @transform_1, window_bounds = array<i64: 16, 4>}, {pipeline_mode = #tpu.pipeline_mode<synchronous>, transform_indices = @transform_2, window_bounds = array<i64: 1, 4>}, {pipeline_mode = #tpu.pipeline_mode<synchronous>, transform_indices = @transform_3, window_bounds = array<i64: 1, 4>}, {pipeline_mode = #tpu.pipeline_mode<synchronous>, transform_indices = @transform_4, window_bounds = array<i64: 9, 4, 4>}, {pipeline_mode = #tpu.pipeline_mode<synchronous>, transform_indices = @transform_5, window_bounds = array<i64: 1, 4>}, {pipeline_mode = #tpu.pipeline_mode<synchronous>, transform_indices = @transform_6, window_bounds = array<i64: 1, 4>}, {pipeline_mode = #tpu.pipeline_mode<synchronous>, transform_indices = @transform_7, window_bounds = array<i64: 4, 16>}, {pipeline_mode = #tpu.pipeline_mode<synchronous>, transform_indices = @transform_8, window_bounds = array<i64: 1, 16>}, {pipeline_mode = #tpu.pipeline_mode<synchronous>, transform_indices = @transform_9, window_bounds = array<i64: 1, 16>}, {transform_indices = @transform_10, window_bounds = array<i64: 1, 64, 16>}]} {
    %cst = arith.constant 0.000000e+00 : bf16
    %0 = vector.broadcast %cst : bf16 to vector<1x10x4xbf16>
    %cst_0 = arith.constant 0.000000e+00 : bf16
    %1 = vector.broadcast %cst_0 : bf16 to vector<10x1x4xbf16>
    %c0 = arith.constant 0 : index
    %c0_1 = arith.constant 0 : index
    %c0_2 = arith.constant 0 : index
    %2 = vector.load %arg12[%c0, %c0_1, %c0_2] : memref<10x10x4xbf16, #tpu.memory_space<vmem>>, vector<1x10x4xbf16>
    tpu.vector_store %arg12[%c0, %c0_1, %c0_2], %0 {strides = array<i32>} : memref<10x10x4xbf16, #tpu.memory_space<vmem>>, vector<1x10x4xbf16>,
    %c9 = arith.constant 9 : index
    %c0_3 = arith.constant 0 : index
    %c0_4 = arith.constant 0 : index
    %3 = vector.load %arg12[%c9, %c0_3, %c0_4] : memref<10x10x4xbf16, #tpu.memory_space<vmem>>, vector<1x10x4xbf16>
    tpu.vector_store %arg12[%c9, %c0_3, %c0_4], %0 {strides = array<i32>} : memref<10x10x4xbf16, #tpu.memory_space<vmem>>, vector<1x10x4xbf16>,
    %c0_5 = arith.constant 0 : index
    %c0_6 = arith.constant 0 : index
    %c0_7 = arith.constant 0 : index
    %4 = vector.load %arg12[%c0_5, %c0_6, %c0_7] : memref<10x10x4xbf16, #tpu.memory_space<vmem>>, vector<10x1x4xbf16>
    tpu.vector_store %arg12[%c0_5, %c0_6, %c0_7], %1 {strides = array<i32>} : memref<10x10x4xbf16, #tpu.memory_space<vmem>>, vector<10x1x4xbf16>,
    %c0_8 = arith.constant 0 : index
    %c9_9 = arith.constant 9 : index
    %c0_10 = arith.constant 0 : index
    %5 = vector.load %arg12[%c0_8, %c9_9, %c0_10] : memref<10x10x4xbf16, #tpu.memory_space<vmem>>, vector<10x1x4xbf16>
    tpu.vector_store %arg12[%c0_8, %c9_9, %c0_10], %1 {strides = array<i32>} : memref<10x10x4xbf16, #tpu.memory_space<vmem>>, vector<10x1x4xbf16>,
    %c0_11 = arith.constant 0 : index
    %c0_12 = arith.constant 0 : index
    %c0_13 = arith.constant 0 : index
    %6 = vector.load %arg1[%c0_11, %c0_12, %c0_13] : memref<1x64x16xbf16, #tpu.memory_space<vmem>>, vector<1x64x16xbf16>
    %7 = vector.shape_cast %6 : vector<1x64x16xbf16> to vector<64x16xbf16>
    %c0_14 = arith.constant 0 : index
    %c0_15 = arith.constant 0 : index
    %8 = vector.load %arg2[%c0_14, %c0_15] : memref<16x4xbf16, #tpu.memory_space<vmem>>, vector<16x4xbf16>
    %cst_16 = arith.constant dense<0.000000e+00> : vector<64x4xf32>
    %9 = tpu.matmul %7, %8, %cst_16 {dimension_numbers = #tpu.dot_dimension_numbers<[1], [0], [0], [1], [0, 0, 1, 1], [], []>} : vector<64x16xbf16>, vector<16x4xbf16>, vector<64x4xf32> -> vector<64x4xf32>
    %c0_17 = arith.constant 0 : index
    %c0_18 = arith.constant 0 : index
    %10 = vector.load %arg3[%c0_17, %c0_18] : memref<1x4xf32, #tpu.memory_space<vmem>>, vector<1x4xf32>
    %11 = vector.broadcast %10 : vector<1x4xf32> to vector<64x4xf32>
    %12 = arith.mulf %9, %11 : vector<64x4xf32>
    %c0_19 = arith.constant 0 : index
    %c0_20 = arith.constant 0 : index
    %13 = vector.load %arg4[%c0_19, %c0_20] : memref<1x4xf32, #tpu.memory_space<vmem>>, vector<1x4xf32>
    %14 = vector.broadcast %13 : vector<1x4xf32> to vector<64x4xf32>
    %15 = arith.addf %12, %14 : vector<64x4xf32>
    %cst_21 = arith.constant 0.000000e+00 : f32
    %16 = vector.broadcast %cst_21 : f32 to vector<64x4xf32>
    %17 = arith.maximumf %15, %16 : vector<64x4xf32>
    %18 = vector.shape_cast %17 : vector<64x4xf32> to vector<8x8x4xf32>
    %19 = arith.truncf %18 : vector<8x8x4xf32> to vector<8x8x4xbf16>
    %c1 = arith.constant 1 : index
    %c1_22 = arith.constant 1 : index
    %c0_23 = arith.constant 0 : index
    %20 = vector.load %arg12[%c1, %c1_22, %c0_23] : memref<10x10x4xbf16, #tpu.memory_space<vmem>>, vector<8x8x4xbf16>
    tpu.vector_store %arg12[%c1, %c1_22, %c0_23], %19 {strides = array<i32>} : memref<10x10x4xbf16, #tpu.memory_space<vmem>>, vector<8x8x4xbf16>,
    %c0_24 = arith.constant 0 : index
    %c0_25 = arith.constant 0 : index
    %c0_26 = arith.constant 0 : index
    %21 = vector.load %arg12[%c0_24, %c0_25, %c0_26] : memref<10x10x4xbf16, #tpu.memory_space<vmem>>, vector<8x8x4xbf16>
    %22 = vector.shape_cast %21 : vector<8x8x4xbf16> to vector<64x4xbf16>
    %c0_27 = arith.constant 0 : index
    %c0_28 = arith.constant 0 : index
    %c0_29 = arith.constant 0 : index
    %23 = vector.load %arg5[%c0_27, %c0_28, %c0_29] : memref<9x4x4xbf16, #tpu.memory_space<vmem>>, vector<1x4x4xbf16>
    %24 = vector.shape_cast %23 : vector<1x4x4xbf16> to vector<4x4xbf16>
    %cst_30 = arith.constant dense<0.000000e+00> : vector<64x4xf32>
    %25 = tpu.matmul %22, %24, %cst_30 {dimension_numbers = #tpu.dot_dimension_numbers<[1], [0], [0], [1], [0, 0, 1, 1], [], []>} : vector<64x4xbf16>, vector<4x4xbf16>, vector<64x4xf32> -> vector<64x4xf32>
    %c0_31 = arith.constant 0 : index
    %c0_32 = arith.constant 0 : index
    %26 = vector.load %arg13[%c0_31, %c0_32] : memref<64x4xf32, #tpu.memory_space<vmem>>, vector<64x4xf32>
    tpu.vector_store %arg13[%c0_31, %c0_32], %25 {strides = array<i32>} : memref<64x4xf32, #tpu.memory_space<vmem>>, vector<64x4xf32>,
    %c0_33 = arith.constant 0 : index
    %c1_34 = arith.constant 1 : index
    %c0_35 = arith.constant 0 : index
    %27 = vector.load %arg12[%c0_33, %c1_34, %c0_35] : memref<10x10x4xbf16, #tpu.memory_space<vmem>>, vector<8x8x4xbf16>
    %28 = vector.shape_cast %27 : vector<8x8x4xbf16> to vector<64x4xbf16>
    %c1_36 = arith.constant 1 : index
    %c0_37 = arith.constant 0 : index
    %c0_38 = arith.constant 0 : index
    %29 = vector.load %arg5[%c1_36, %c0_37, %c0_38] : memref<9x4x4xbf16, #tpu.memory_space<vmem>>, vector<1x4x4xbf16>
    %30 = vector.shape_cast %29 : vector<1x4x4xbf16> to vector<4x4xbf16>
    %cst_39 = arith.constant dense<0.000000e+00> : vector<64x4xf32>
    %31 = tpu.matmul %28, %30, %cst_39 {dimension_numbers = #tpu.dot_dimension_numbers<[1], [0], [0], [1], [0, 0, 1, 1], [], []>} : vector<64x4xbf16>, vector<4x4xbf16>, vector<64x4xf32> -> vector<64x4xf32>
    %c0_40 = arith.constant 0 : index
    %c0_41 = arith.constant 0 : index
    %32 = vector.load %arg13[%c0_40, %c0_41] : memref<64x4xf32, #tpu.memory_space<vmem>>, vector<64x4xf32>
    %33 = arith.addf %32, %31 : vector<64x4xf32>
    %c0_42 = arith.constant 0 : index
    %c0_43 = arith.constant 0 : index
    %34 = vector.load %arg13[%c0_42, %c0_43] : memref<64x4xf32, #tpu.memory_space<vmem>>, vector<64x4xf32>
    tpu.vector_store %arg13[%c0_42, %c0_43], %33 {strides = array<i32>} : memref<64x4xf32, #tpu.memory_space<vmem>>, vector<64x4xf32>,
    %c0_44 = arith.constant 0 : index
    %c2 = arith.constant 2 : index
    %c0_45 = arith.constant 0 : index
    %35 = vector.load %arg12[%c0_44, %c2, %c0_45] : memref<10x10x4xbf16, #tpu.memory_space<vmem>>, vector<8x8x4xbf16>
    %36 = vector.shape_cast %35 : vector<8x8x4xbf16> to vector<64x4xbf16>
    %c2_46 = arith.constant 2 : index
    %c0_47 = arith.constant 0 : index
    %c0_48 = arith.constant 0 : index
    %37 = vector.load %arg5[%c2_46, %c0_47, %c0_48] : memref<9x4x4xbf16, #tpu.memory_space<vmem>>, vector<1x4x4xbf16>
    %38 = vector.shape_cast %37 : vector<1x4x4xbf16> to vector<4x4xbf16>
    %cst_49 = arith.constant dense<0.000000e+00> : vector<64x4xf32>
    %39 = tpu.matmul %36, %38, %cst_49 {dimension_numbers = #tpu.dot_dimension_numbers<[1], [0], [0], [1], [0, 0, 1, 1], [], []>} : vector<64x4xbf16>, vector<4x4xbf16>, vector<64x4xf32> -> vector<64x4xf32>
    %c0_50 = arith.constant 0 : index
    %c0_51 = arith.constant 0 : index
    %40 = vector.load %arg13[%c0_50, %c0_51] : memref<64x4xf32, #tpu.memory_space<vmem>>, vector<64x4xf32>
    %41 = arith.addf %40, %39 : vector<64x4xf32>
    %c0_52 = arith.constant 0 : index
    %c0_53 = arith.constant 0 : index
    %42 = vector.load %arg13[%c0_52, %c0_53] : memref<64x4xf32, #tpu.memory_space<vmem>>, vector<64x4xf32>
    tpu.vector_store %arg13[%c0_52, %c0_53], %41 {strides = array<i32>} : memref<64x4xf32, #tpu.memory_space<vmem>>, vector<64x4xf32>,
    %c1_54 = arith.constant 1 : index
    %c0_55 = arith.constant 0 : index
    %c0_56 = arith.constant 0 : index
    %43 = vector.load %arg12[%c1_54, %c0_55, %c0_56] : memref<10x10x4xbf16, #tpu.memory_space<vmem>>, vector<8x8x4xbf16>
    %44 = vector.shape_cast %43 : vector<8x8x4xbf16> to vector<64x4xbf16>
    %c3 = arith.constant 3 : index
    %c0_57 = arith.constant 0 : index
    %c0_58 = arith.constant 0 : index
    %45 = vector.load %arg5[%c3, %c0_57, %c0_58] : memref<9x4x4xbf16, #tpu.memory_space<vmem>>, vector<1x4x4xbf16>
    %46 = vector.shape_cast %45 : vector<1x4x4xbf16> to vector<4x4xbf16>
    %cst_59 = arith.constant dense<0.000000e+00> : vector<64x4xf32>
    %47 = tpu.matmul %44, %46, %cst_59 {dimension_numbers = #tpu.dot_dimension_numbers<[1], [0], [0], [1], [0, 0, 1, 1], [], []>} : vector<64x4xbf16>, vector<4x4xbf16>, vector<64x4xf32> -> vector<64x4xf32>
    %c0_60 = arith.constant 0 : index
    %c0_61 = arith.constant 0 : index
    %48 = vector.load %arg13[%c0_60, %c0_61] : memref<64x4xf32, #tpu.memory_space<vmem>>, vector<64x4xf32>
    %49 = arith.addf %48, %47 : vector<64x4xf32>
    %c0_62 = arith.constant 0 : index
    %c0_63 = arith.constant 0 : index
    %50 = vector.load %arg13[%c0_62, %c0_63] : memref<64x4xf32, #tpu.memory_space<vmem>>, vector<64x4xf32>
    tpu.vector_store %arg13[%c0_62, %c0_63], %49 {strides = array<i32>} : memref<64x4xf32, #tpu.memory_space<vmem>>, vector<64x4xf32>,
    %c1_64 = arith.constant 1 : index
    %c1_65 = arith.constant 1 : index
    %c0_66 = arith.constant 0 : index
    %51 = vector.load %arg12[%c1_64, %c1_65, %c0_66] : memref<10x10x4xbf16, #tpu.memory_space<vmem>>, vector<8x8x4xbf16>
    %52 = vector.shape_cast %51 : vector<8x8x4xbf16> to vector<64x4xbf16>
    %c4 = arith.constant 4 : index
    %c0_67 = arith.constant 0 : index
    %c0_68 = arith.constant 0 : index
    %53 = vector.load %arg5[%c4, %c0_67, %c0_68] : memref<9x4x4xbf16, #tpu.memory_space<vmem>>, vector<1x4x4xbf16>
    %54 = vector.shape_cast %53 : vector<1x4x4xbf16> to vector<4x4xbf16>
    %cst_69 = arith.constant dense<0.000000e+00> : vector<64x4xf32>
    %55 = tpu.matmul %52, %54, %cst_69 {dimension_numbers = #tpu.dot_dimension_numbers<[1], [0], [0], [1], [0, 0, 1, 1], [], []>} : vector<64x4xbf16>, vector<4x4xbf16>, vector<64x4xf32> -> vector<64x4xf32>
    %c0_70 = arith.constant 0 : index
    %c0_71 = arith.constant 0 : index
    %56 = vector.load %arg13[%c0_70, %c0_71] : memref<64x4xf32, #tpu.memory_space<vmem>>, vector<64x4xf32>
    %57 = arith.addf %56, %55 : vector<64x4xf32>
    %c0_72 = arith.constant 0 : index
    %c0_73 = arith.constant 0 : index
    %58 = vector.load %arg13[%c0_72, %c0_73] : memref<64x4xf32, #tpu.memory_space<vmem>>, vector<64x4xf32>
    tpu.vector_store %arg13[%c0_72, %c0_73], %57 {strides = array<i32>} : memref<64x4xf32, #tpu.memory_space<vmem>>, vector<64x4xf32>,
    %c1_74 = arith.constant 1 : index
    %c2_75 = arith.constant 2 : index
    %c0_76 = arith.constant 0 : index
    %59 = vector.load %arg12[%c1_74, %c2_75, %c0_76] : memref<10x10x4xbf16, #tpu.memory_space<vmem>>, vector<8x8x4xbf16>
    %60 = vector.shape_cast %59 : vector<8x8x4xbf16> to vector<64x4xbf16>
    %c5 = arith.constant 5 : index
    %c0_77 = arith.constant 0 : index
    %c0_78 = arith.constant 0 : index
    %61 = vector.load %arg5[%c5, %c0_77, %c0_78] : memref<9x4x4xbf16, #tpu.memory_space<vmem>>, vector<1x4x4xbf16>
    %62 = vector.shape_cast %61 : vector<1x4x4xbf16> to vector<4x4xbf16>
    %cst_79 = arith.constant dense<0.000000e+00> : vector<64x4xf32>
    %63 = tpu.matmul %60, %62, %cst_79 {dimension_numbers = #tpu.dot_dimension_numbers<[1], [0], [0], [1], [0, 0, 1, 1], [], []>} : vector<64x4xbf16>, vector<4x4xbf16>, vector<64x4xf32> -> vector<64x4xf32>
    %c0_80 = arith.constant 0 : index
    %c0_81 = arith.constant 0 : index
    %64 = vector.load %arg13[%c0_80, %c0_81] : memref<64x4xf32, #tpu.memory_space<vmem>>, vector<64x4xf32>
    %65 = arith.addf %64, %63 : vector<64x4xf32>
    %c0_82 = arith.constant 0 : index
    %c0_83 = arith.constant 0 : index
    %66 = vector.load %arg13[%c0_82, %c0_83] : memref<64x4xf32, #tpu.memory_space<vmem>>, vector<64x4xf32>
    tpu.vector_store %arg13[%c0_82, %c0_83], %65 {strides = array<i32>} : memref<64x4xf32, #tpu.memory_space<vmem>>, vector<64x4xf32>,
    %c2_84 = arith.constant 2 : index
    %c0_85 = arith.constant 0 : index
    %c0_86 = arith.constant 0 : index
    %67 = vector.load %arg12[%c2_84, %c0_85, %c0_86] : memref<10x10x4xbf16, #tpu.memory_space<vmem>>, vector<8x8x4xbf16>
    %68 = vector.shape_cast %67 : vector<8x8x4xbf16> to vector<64x4xbf16>
    %c6 = arith.constant 6 : index
    %c0_87 = arith.constant 0 : index
    %c0_88 = arith.constant 0 : index
    %69 = vector.load %arg5[%c6, %c0_87, %c0_88] : memref<9x4x4xbf16, #tpu.memory_space<vmem>>, vector<1x4x4xbf16>
    %70 = vector.shape_cast %69 : vector<1x4x4xbf16> to vector<4x4xbf16>
    %cst_89 = arith.constant dense<0.000000e+00> : vector<64x4xf32>
    %71 = tpu.matmul %68, %70, %cst_89 {dimension_numbers = #tpu.dot_dimension_numbers<[1], [0], [0], [1], [0, 0, 1, 1], [], []>} : vector<64x4xbf16>, vector<4x4xbf16>, vector<64x4xf32> -> vector<64x4xf32>
    %c0_90 = arith.constant 0 : index
    %c0_91 = arith.constant 0 : index
    %72 = vector.load %arg13[%c0_90, %c0_91] : memref<64x4xf32, #tpu.memory_space<vmem>>, vector<64x4xf32>
    %73 = arith.addf %72, %71 : vector<64x4xf32>
    %c0_92 = arith.constant 0 : index
    %c0_93 = arith.constant 0 : index
    %74 = vector.load %arg13[%c0_92, %c0_93] : memref<64x4xf32, #tpu.memory_space<vmem>>, vector<64x4xf32>
    tpu.vector_store %arg13[%c0_92, %c0_93], %73 {strides = array<i32>} : memref<64x4xf32, #tpu.memory_space<vmem>>, vector<64x4xf32>,
    %c2_94 = arith.constant 2 : index
    %c1_95 = arith.constant 1 : index
    %c0_96 = arith.constant 0 : index
    %75 = vector.load %arg12[%c2_94, %c1_95, %c0_96] : memref<10x10x4xbf16, #tpu.memory_space<vmem>>, vector<8x8x4xbf16>
    %76 = vector.shape_cast %75 : vector<8x8x4xbf16> to vector<64x4xbf16>
    %c7 = arith.constant 7 : index
    %c0_97 = arith.constant 0 : index
    %c0_98 = arith.constant 0 : index
    %77 = vector.load %arg5[%c7, %c0_97, %c0_98] : memref<9x4x4xbf16, #tpu.memory_space<vmem>>, vector<1x4x4xbf16>
    %78 = vector.shape_cast %77 : vector<1x4x4xbf16> to vector<4x4xbf16>
    %cst_99 = arith.constant dense<0.000000e+00> : vector<64x4xf32>
    %79 = tpu.matmul %76, %78, %cst_99 {dimension_numbers = #tpu.dot_dimension_numbers<[1], [0], [0], [1], [0, 0, 1, 1], [], []>} : vector<64x4xbf16>, vector<4x4xbf16>, vector<64x4xf32> -> vector<64x4xf32>
    %c0_100 = arith.constant 0 : index
    %c0_101 = arith.constant 0 : index
    %80 = vector.load %arg13[%c0_100, %c0_101] : memref<64x4xf32, #tpu.memory_space<vmem>>, vector<64x4xf32>
    %81 = arith.addf %80, %79 : vector<64x4xf32>
    %c0_102 = arith.constant 0 : index
    %c0_103 = arith.constant 0 : index
    %82 = vector.load %arg13[%c0_102, %c0_103] : memref<64x4xf32, #tpu.memory_space<vmem>>, vector<64x4xf32>
    tpu.vector_store %arg13[%c0_102, %c0_103], %81 {strides = array<i32>} : memref<64x4xf32, #tpu.memory_space<vmem>>, vector<64x4xf32>,
    %c2_104 = arith.constant 2 : index
    %c2_105 = arith.constant 2 : index
    %c0_106 = arith.constant 0 : index
    %83 = vector.load %arg12[%c2_104, %c2_105, %c0_106] : memref<10x10x4xbf16, #tpu.memory_space<vmem>>, vector<8x8x4xbf16>
    %84 = vector.shape_cast %83 : vector<8x8x4xbf16> to vector<64x4xbf16>
    %c8 = arith.constant 8 : index
    %c0_107 = arith.constant 0 : index
    %c0_108 = arith.constant 0 : index
    %85 = vector.load %arg5[%c8, %c0_107, %c0_108] : memref<9x4x4xbf16, #tpu.memory_space<vmem>>, vector<1x4x4xbf16>
    %86 = vector.shape_cast %85 : vector<1x4x4xbf16> to vector<4x4xbf16>
    %cst_109 = arith.constant dense<0.000000e+00> : vector<64x4xf32>
    %87 = tpu.matmul %84, %86, %cst_109 {dimension_numbers = #tpu.dot_dimension_numbers<[1], [0], [0], [1], [0, 0, 1, 1], [], []>} : vector<64x4xbf16>, vector<4x4xbf16>, vector<64x4xf32> -> vector<64x4xf32>
    %c0_110 = arith.constant 0 : index
    %c0_111 = arith.constant 0 : index
    %88 = vector.load %arg13[%c0_110, %c0_111] : memref<64x4xf32, #tpu.memory_space<vmem>>, vector<64x4xf32>
    %89 = arith.addf %88, %87 : vector<64x4xf32>
    %c0_112 = arith.constant 0 : index
    %c0_113 = arith.constant 0 : index
    %90 = vector.load %arg13[%c0_112, %c0_113] : memref<64x4xf32, #tpu.memory_space<vmem>>, vector<64x4xf32>
    tpu.vector_store %arg13[%c0_112, %c0_113], %89 {strides = array<i32>} : memref<64x4xf32, #tpu.memory_space<vmem>>, vector<64x4xf32>,
    %c0_114 = arith.constant 0 : index
    %c0_115 = arith.constant 0 : index
    %91 = vector.load %arg13[%c0_114, %c0_115] : memref<64x4xf32, #tpu.memory_space<vmem>>, vector<64x4xf32>
    %c0_116 = arith.constant 0 : index
    %c0_117 = arith.constant 0 : index
    %92 = vector.load %arg6[%c0_116, %c0_117] : memref<1x4xf32, #tpu.memory_space<vmem>>, vector<1x4xf32>
    %93 = vector.broadcast %92 : vector<1x4xf32> to vector<64x4xf32>
    %94 = arith.mulf %91, %93 : vector<64x4xf32>
    %c0_118 = arith.constant 0 : index
    %c0_119 = arith.constant 0 : index
    %95 = vector.load %arg7[%c0_118, %c0_119] : memref<1x4xf32, #tpu.memory_space<vmem>>, vector<1x4xf32>
    %96 = vector.broadcast %95 : vector<1x4xf32> to vector<64x4xf32>
    %97 = arith.addf %94, %96 : vector<64x4xf32>
    %cst_120 = arith.constant 0.000000e+00 : f32
    %98 = vector.broadcast %cst_120 : f32 to vector<64x4xf32>
    %99 = arith.maximumf %97, %98 : vector<64x4xf32>
    %100 = arith.truncf %99 : vector<64x4xf32> to vector<64x4xbf16>
    %c0_121 = arith.constant 0 : index
    %c0_122 = arith.constant 0 : index
    %101 = vector.load %arg8[%c0_121, %c0_122] : memref<4x16xbf16, #tpu.memory_space<vmem>>, vector<4x16xbf16>
    %cst_123 = arith.constant dense<0.000000e+00> : vector<64x16xf32>
    %102 = tpu.matmul %100, %101, %cst_123 {dimension_numbers = #tpu.dot_dimension_numbers<[1], [0], [0], [1], [0, 0, 1, 1], [], []>} : vector<64x4xbf16>, vector<4x16xbf16>, vector<64x16xf32> -> vector<64x16xf32>
    %c0_124 = arith.constant 0 : index
    %c0_125 = arith.constant 0 : index
    %103 = vector.load %arg9[%c0_124, %c0_125] : memref<1x16xf32, #tpu.memory_space<vmem>>, vector<1x16xf32>
    %104 = vector.broadcast %103 : vector<1x16xf32> to vector<64x16xf32>
    %105 = arith.mulf %102, %104 : vector<64x16xf32>
    %c0_126 = arith.constant 0 : index
    %c0_127 = arith.constant 0 : index
    %106 = vector.load %arg10[%c0_126, %c0_127] : memref<1x16xf32, #tpu.memory_space<vmem>>, vector<1x16xf32>
    %107 = vector.broadcast %106 : vector<1x16xf32> to vector<64x16xf32>
    %108 = arith.addf %105, %107 : vector<64x16xf32>
    %109 = arith.extf %7 : vector<64x16xbf16> to vector<64x16xf32>
    %110 = arith.addf %108, %109 : vector<64x16xf32>
    %cst_128 = arith.constant 0.000000e+00 : f32
    %111 = vector.broadcast %cst_128 : f32 to vector<64x16xf32>
    %112 = arith.maximumf %110, %111 : vector<64x16xf32>
    %113 = arith.truncf %112 : vector<64x16xf32> to vector<64x16xbf16>
    %c0_129 = arith.constant 0 : index
    %c0_130 = arith.constant 0 : index
    %c0_131 = arith.constant 0 : index
    %114 = vector.load %arg11[%c0_129, %c0_130, %c0_131] : memref<1x64x16xbf16, #tpu.memory_space<vmem>>, vector<1x64x16xbf16>
    %115 = vector.shape_cast %114 : vector<1x64x16xbf16> to vector<64x16xbf16>
    %116 = vector.shape_cast %113 : vector<64x16xbf16> to vector<1x64x16xbf16>
    tpu.vector_store %arg11[%c0_129, %c0_130, %c0_131], %116 {strides = array<i32>} : memref<1x64x16xbf16, #tpu.memory_space<vmem>>, vector<1x64x16xbf16>,
    return
  }
  func.func @transform_0(%arg0: i32) -> (i32, i32, i32) {
    %c0_i32 = arith.constant 0 : i32
    %c0_i32_0 = arith.constant 0 : i32
    %c0_i32_1 = arith.constant 0 : i32
    return %arg0, %c0_i32, %c0_i32_0 : i32, i32, i32
  }
  func.func @transform_1(%arg0: i32) -> (i32, i32) {
    %c0_i32 = arith.constant 0 : i32
    %c0_i32_0 = arith.constant 0 : i32
    %c0_i32_1 = arith.constant 0 : i32
    return %c0_i32, %c0_i32_0 : i32, i32
  }
  func.func @transform_2(%arg0: i32) -> (i32, i32) {
    %c0_i32 = arith.constant 0 : i32
    %c0_i32_0 = arith.constant 0 : i32
    %c0_i32_1 = arith.constant 0 : i32
    return %c0_i32, %c0_i32_0 : i32, i32
  }
  func.func @transform_3(%arg0: i32) -> (i32, i32) {
    %c0_i32 = arith.constant 0 : i32
    %c0_i32_0 = arith.constant 0 : i32
    %c0_i32_1 = arith.constant 0 : i32
    return %c0_i32, %c0_i32_0 : i32, i32
  }
  func.func @transform_4(%arg0: i32) -> (i32, i32, i32) {
    %c0_i32 = arith.constant 0 : i32
    %c0_i32_0 = arith.constant 0 : i32
    %c0_i32_1 = arith.constant 0 : i32
    %c0_i32_2 = arith.constant 0 : i32
    return %c0_i32, %c0_i32_0, %c0_i32_1 : i32, i32, i32
  }
  func.func @transform_5(%arg0: i32) -> (i32, i32) {
    %c0_i32 = arith.constant 0 : i32
    %c0_i32_0 = arith.constant 0 : i32
    %c0_i32_1 = arith.constant 0 : i32
    return %c0_i32, %c0_i32_0 : i32, i32
  }
  func.func @transform_6(%arg0: i32) -> (i32, i32) {
    %c0_i32 = arith.constant 0 : i32
    %c0_i32_0 = arith.constant 0 : i32
    %c0_i32_1 = arith.constant 0 : i32
    return %c0_i32, %c0_i32_0 : i32, i32
  }
  func.func @transform_7(%arg0: i32) -> (i32, i32) {
    %c0_i32 = arith.constant 0 : i32
    %c0_i32_0 = arith.constant 0 : i32
    %c0_i32_1 = arith.constant 0 : i32
    return %c0_i32, %c0_i32_0 : i32, i32
  }
  func.func @transform_8(%arg0: i32) -> (i32, i32) {
    %c0_i32 = arith.constant 0 : i32
    %c0_i32_0 = arith.constant 0 : i32
    %c0_i32_1 = arith.constant 0 : i32
    return %c0_i32, %c0_i32_0 : i32, i32
  }
  func.func @transform_9(%arg0: i32) -> (i32, i32) {
    %c0_i32 = arith.constant 0 : i32
    %c0_i32_0 = arith.constant 0 : i32
    %c0_i32_1 = arith.constant 0 : i32
    return %c0_i32, %c0_i32_0 : i32, i32
  }
  func.func @transform_10(%arg0: i32) -> (i32, i32, i32) {
    %c0_i32 = arith.constant 0 : i32
    %c0_i32_0 = arith.constant 0 : i32
    %c0_i32_1 = arith.constant 0 : i32
    return %arg0, %c0_i32, %c0_i32_0 : i32, i32, i32
  }
}

</mosaic_0001>

<llo_original>
// kernel: tpu_custom_call.1
$region0: #{tpu_custom_call.1}
  #allocation0 [shape = 'u32[]', space=smem, size = 0x4, offset = 0x4, fixed_abs, tag = 'smem constant byte address 0x4 - core index']
  #allocation1 [shape = 'u32[72,128]{1,0:T(1,128)}', space=vmem, size = 0x9000, scoped, tag = 'internal scratch']
  #allocation2 [shape = 'bf16[10,10,4]{2,1,0:T(8,128)(2,1)}', space=vmem, size = 0xa000, scoped, tag = 'scratch operand']
  #allocation3 [shape = 'f32[64,4]{1,0:T(8,128)}', space=vmem, size = 0x8000, scoped, tag = 'scratch operand']
  %s0 = inlined_call_operand.vmem [shape: bf16[2,64,16], index: 0, kind: input, shape index: {}]
  %s1 = inlined_call_operand.vmem [shape: bf16[16,4], index: 1, kind: input, shape index: {}]
  %s2 = inlined_call_operand.vmem [shape: f32[1,4], index: 2, kind: input, shape index: {}]
  %s3 = inlined_call_operand.vmem [shape: f32[1,4], index: 3, kind: input, shape index: {}]
  %s4 = inlined_call_operand.vmem [shape: bf16[9,4,4], index: 4, kind: input, shape index: {}]
  %s5 = inlined_call_operand.vmem [shape: f32[1,4], index: 5, kind: input, shape index: {}]
  %s6 = inlined_call_operand.vmem [shape: f32[1,4], index: 6, kind: input, shape index: {}]
  %s7 = inlined_call_operand.vmem [shape: bf16[4,16], index: 7, kind: input, shape index: {}]
  %s8 = inlined_call_operand.vmem [shape: f32[1,16], index: 8, kind: input, shape index: {}]
  %s9 = inlined_call_operand.vmem [shape: f32[1,16], index: 9, kind: input, shape index: {}]
  %s10 = inlined_call_operand.vmem [shape: bf16[2,64,16], index: 10, kind: output, shape index: {}]
  %s11 = sld [smem:[#allocation0]]
  $region73: #{tpu_custom_call.1} parent=0
    _
  %s13 = ssub.s32 1, %s11
  %s14 = scalar_select 0, %s13, %s11
  loop: start=0, step=1, limit=4
  $region2: #{tpu_custom_call.1} parent=0 // loop_pre_header
    _
  $region3: #{tpu_custom_call.1} parent=0 // loop_header
    %s16 = sphi 0, %s20
    %p17 = scmp.ge.s32.totalorder %s16, 4
    %s26 = sphi 0, %s28
    %s29 = sphi 0, %s26
    %s30 = sphi 0, %s29
    %s46 = sphi 0, %s30
    %s50 = sphi 0, %s50
    %s52 = sphi 0, %s50
    %s53 = sphi 0, %s52
    %s67 = sphi 0, %s53
    %s71 = sphi 0, %s71
    %s73 = sphi 0, %s71
    %s74 = sphi 0, %s73
    %s88 = sphi 0, %s74
    %s92 = sphi 0, %s92
    %s94 = sphi 0, %s92
    %s95 = sphi 0, %s94
    %s109 = sphi 0, %s95
    %s113 = sphi 0, %s113
    %s115 = sphi 0, %s113
    %s116 = sphi 0, %s115
    %s130 = sphi 0, %s116
    %s134 = sphi 0, %s134
    %s136 = sphi 0, %s134
    %s137 = sphi 0, %s136
    %s151 = sphi 0, %s137
    %s155 = sphi 0, %s155
    %s157 = sphi 0, %s155
    %s158 = sphi 0, %s157
    %s172 = sphi 0, %s158
    %s176 = sphi 0, %s176
    %s178 = sphi 0, %s176
    %s179 = sphi 0, %s178
    %s193 = sphi 0, %s179
    %s197 = sphi 0, %s197
    %s199 = sphi 0, %s197
    %s200 = sphi 0, %s199
    %s214 = sphi 0, %s200
    %s218 = sphi 0, %s218
    %s220 = sphi 0, %s218
    %s221 = sphi 0, %s220
    %s235 = sphi 0, %s221
    %s241 = sphi 0, %s243
    %s244 = sphi 0, %s241
    %s245 = sphi 0, %s244
    %s261 = sphi 0, %s245
  $region4: #{tpu_custom_call.1} parent=0 // loop_header_branch
    %19 = sbr.rel (%p17) target = $region8
  $region5: #{tpu_custom_call.1} parent=0 // loop_body
    %s21 = ssub.s32 %s16, 1
    %s22 = ssub.s32 %s16, 2
    %s23 = sadd.s32 %s16, 1
    %s24 = ssub.s32 %s16, %s23
    %p25 = scmp.eq.s32.totalorder %s24, 0
    %s27 = sadd.s32 %s26, 1
    %s28 = scalar_select %p25, %s26, %s27
    %p31 = pneg %p25
    %p32 = scmp.eq.s32.totalorder %s16, 1
    %p33 = por %p31, %p32
    %p34 = scmp.ne.s32.totalorder %s26, %s29
    %p35 = scmp.eq.s32.totalorder %s16, 0
    %p36 = por %p34, %p35
    %p37 = scmp.ne.s32.totalorder %s26, %s29
    %p38 = scmp.eq.s32.totalorder %s21, 1
    %p39 = por %p37, %p38
    %p40 = scmp.ne.s32.totalorder %s29, %s30
    %p41 = scmp.eq.s32.totalorder %s21, 0
    %p42 = por %p40, %p41
    %p43 = scmp.ne.s32.totalorder %s29, %s30
    %p44 = scmp.eq.s32.totalorder %s22, 1
    %p45 = por %p43, %p44
    %p47 = scmp.ne.s32.totalorder %s30, %s46
    %p48 = scmp.eq.s32.totalorder %s22, 0
    %p49 = por %p47, %p48
    %s51 = sadd.s32 %s50, 1
    %p54 = scmp.eq.s32.totalorder %s16, 1
    %p55 = scmp.ne.s32.totalorder %s50, %s52
    %p56 = scmp.eq.s32.totalorder %s16, 0
    %p57 = por %p55, %p56
    %p58 = scmp.ne.s32.totalorder %s50, %s52
    %p59 = scmp.eq.s32.totalorder %s21, 1
    %p60 = por %p58, %p59
    %p61 = scmp.ne.s32.totalorder %s52, %s53
    %p62 = scmp.eq.s32.totalorder %s21, 0
    %p63 = por %p61, %p62
    %p64 = scmp.ne.s32.totalorder %s52, %s53
    %p65 = scmp.eq.s32.totalorder %s22, 1
    %p66 = por %p64, %p65
    %p68 = scmp.ne.s32.totalorder %s53, %s67
    %p69 = scmp.eq.s32.totalorder %s22, 0
    %p70 = por %p68, %p69
    %s72 = sadd.s32 %s71, 1
    %p75 = scmp.eq.s32.totalorder %s16, 1
    %p76 = scmp.ne.s32.totalorder %s71, %s73
    %p77 = scmp.eq.s32.totalorder %s16, 0
    %p78 = por %p76, %p77
    %p79 = scmp.ne.s32.totalorder %s71, %s73
    %p80 = scmp.eq.s32.totalorder %s21, 1
    %p81 = por %p79, %p80
    %p82 = scmp.ne.s32.totalorder %s73, %s74
    %p83 = scmp.eq.s32.totalorder %s21, 0
    %p84 = por %p82, %p83
    %p85 = scmp.ne.s32.totalorder %s73, %s74
    %p86 = scmp.eq.s32.totalorder %s22, 1
    %p87 = por %p85, %p86
    %p89 = scmp.ne.s32.totalorder %s74, %s88
    %p90 = scmp.eq.s32.totalorder %s22, 0
    %p91 = por %p89, %p90
    %s93 = sadd.s32 %s92, 1
    %p96 = scmp.eq.s32.totalorder %s16, 1
    %p97 = scmp.ne.s32.totalorder %s92, %s94
    %p98 = scmp.eq.s32.totalorder %s16, 0
    %p99 = por %p97, %p98
    %p100 = scmp.ne.s32.totalorder %s92, %s94
    %p101 = scmp.eq.s32.totalorder %s21, 1
    %p102 = por %p100, %p101
    %p103 = scmp.ne.s32.totalorder %s94, %s95
    %p104 = scmp.eq.s32.totalorder %s21, 0
    %p105 = por %p103, %p104
    %p106 = scmp.ne.s32.totalorder %s94, %s95
    %p107 = scmp.eq.s32.totalorder %s22, 1
    %p108 = por %p106, %p107
    %p110 = scmp.ne.s32.totalorder %s95, %s109
    %p111 = scmp.eq.s32.totalorder %s22, 0
    %p112 = por %p110, %p111
    %s114 = sadd.s32 %s113, 1
    %p117 = scmp.eq.s32.totalorder %s16, 1
    %p118 = scmp.ne.s32.totalorder %s113, %s115
    %p119 = scmp.eq.s32.totalorder %s16, 0
    %p120 = por %p118, %p119
    %p121 = scmp.ne.s32.totalorder %s113, %s115
    %p122 = scmp.eq.s32.totalorder %s21, 1
    %p123 = por %p121, %p122
    %p124 = scmp.ne.s32.totalorder %s115, %s116
    %p125 = scmp.eq.s32.totalorder %s21, 0
    %p126 = por %p124, %p125
    %p127 = scmp.ne.s32.totalorder %s115, %s116
    %p128 = scmp.eq.s32.totalorder %s22, 1
    %p129 = por %p127, %p128
    %p131 = scmp.ne.s32.totalorder %s116, %s130
    %p132 = scmp.eq.s32.totalorder %s22, 0
    %p133 = por %p131, %p132
    %s135 = sadd.s32 %s134, 1
    %p138 = scmp.eq.s32.totalorder %s16, 1
    %p139 = scmp.ne.s32.totalorder %s134, %s136
    %p140 = scmp.eq.s32.totalorder %s16, 0
    %p141 = por %p139, %p140
    %p142 = scmp.ne.s32.totalorder %s134, %s136
    %p143 = scmp.eq.s32.totalorder %s21, 1
    %p144 = por %p142, %p143
    %p145 = scmp.ne.s32.totalorder %s136, %s137
    %p146 = scmp.eq.s32.totalorder %s21, 0
    %p147 = por %p145, %p146
    %p148 = scmp.ne.s32.totalorder %s136, %s137
    %p149 = scmp.eq.s32.totalorder %s22, 1
    %p150 = por %p148, %p149
    %p152 = scmp.ne.s32.totalorder %s137, %s151
    %p153 = scmp.eq.s32.totalorder %s22, 0
    %p154 = por %p152, %p153
    %s156 = sadd.s32 %s155, 1
    %p159 = scmp.eq.s32.totalorder %s16, 1
    %p160 = scmp.ne.s32.totalorder %s155, %s157
    %p161 = scmp.eq.s32.totalorder %s16, 0
    %p162 = por %p160, %p161
    %p163 = scmp.ne.s32.totalorder %s155, %s157
    %p164 = scmp.eq.s32.totalorder %s21, 1
    %p165 = por %p163, %p164
    %p166 = scmp.ne.s32.totalorder %s157, %s158
    %p167 = scmp.eq.s32.totalorder %s21, 0
    %p168 = por %p166, %p167
    %p169 = scmp.ne.s32.totalorder %s157, %s158
    %p170 = scmp.eq.s32.totalorder %s22, 1
    %p171 = por %p169, %p170
    %p173 = scmp.ne.s32.totalorder %s158, %s172
    %p174 = scmp.eq.s32.totalorder %s22, 0
    %p175 = por %p173, %p174
    %s177 = sadd.s32 %s176, 1
    %p180 = scmp.eq.s32.totalorder %s16, 1
    %p181 = scmp.ne.s32.totalorder %s176, %s178
    %p182 = scmp.eq.s32.totalorder %s16, 0
    %p183 = por %p181, %p182
    %p184 = scmp.ne.s32.totalorder %s176, %s178
    %p185 = scmp.eq.s32.totalorder %s21, 1
    %p186 = por %p184, %p185
    %p187 = scmp.ne.s32.totalorder %s178, %s179
    %p188 = scmp.eq.s32.totalorder %s21, 0
    %p189 = por %p187, %p188
    %p190 = scmp.ne.s32.totalorder %s178, %s179
    %p191 = scmp.eq.s32.totalorder %s22, 1
    %p192 = por %p190, %p191
    %p194 = scmp.ne.s32.totalorder %s179, %s193
    %p195 = scmp.eq.s32.totalorder %s22, 0
    %p196 = por %p194, %p195
    %s198 = sadd.s32 %s197, 1
    %p201 = scmp.eq.s32.totalorder %s16, 1
    %p202 = scmp.ne.s32.totalorder %s197, %s199
    %p203 = scmp.eq.s32.totalorder %s16, 0
    %p204 = por %p202, %p203
    %p205 = scmp.ne.s32.totalorder %s197, %s199
    %p206 = scmp.eq.s32.totalorder %s21, 1
    %p207 = por %p205, %p206
    %p208 = scmp.ne.s32.totalorder %s199, %s200
    %p209 = scmp.eq.s32.totalorder %s21, 0
    %p210 = por %p208, %p209
    %p211 = scmp.ne.s32.totalorder %s199, %s200
    %p212 = scmp.eq.s32.totalorder %s22, 1
    %p213 = por %p211, %p212
    %p215 = scmp.ne.s32.totalorder %s200, %s214
    %p216 = scmp.eq.s32.totalorder %s22, 0
    %p217 = por %p215, %p216
    %s219 = sadd.s32 %s218, 1
    %p222 = scmp.eq.s32.totalorder %s16, 1
    %p223 = scmp.ne.s32.totalorder %s218, %s220
    %p224 = scmp.eq.s32.totalorder %s16, 0
    %p225 = por %p223, %p224
    %p226 = scmp.ne.s32.totalorder %s218, %s220
    %p227 = scmp.eq.s32.totalorder %s21, 1
    %p228 = por %p226, %p227
    %p229 = scmp.ne.s32.totalorder %s220, %s221
    %p230 = scmp.eq.s32.totalorder %s21, 0
    %p231 = por %p229, %p230
    %p232 = scmp.ne.s32.totalorder %s220, %s221
    %p233 = scmp.eq.s32.totalorder %s22, 1
    %p234 = por %p232, %p233
    %p236 = scmp.ne.s32.totalorder %s221, %s235
    %p237 = scmp.eq.s32.totalorder %s22, 0
    %p238 = por %p236, %p237
    %s239 = ssub.s32 %s16, %s23
    %p240 = scmp.eq.s32.totalorder %s239, 0
    %s242 = sadd.s32 %s241, 1
    %s243 = scalar_select %p240, %s241, %s242
    %p246 = pneg %p240
    %p247 = scmp.eq.s32.totalorder %s16, 1
    %p248 = por %p246, %p247
    %p249 = scmp.ne.s32.totalorder %s241, %s244
    %p250 = scmp.eq.s32.totalorder %s16, 0
    %p251 = por %p249, %p250
    %p252 = scmp.ne.s32.totalorder %s241, %s244
    %p253 = scmp.eq.s32.totalorder %s21, 1
    %p254 = por %p252, %p253
    %p255 = scmp.ne.s32.totalorder %s244, %s245
    %p256 = scmp.eq.s32.totalorder %s21, 0
    %p257 = por %p255, %p256
    %p258 = scmp.ne.s32.totalorder %s244, %s245
    %p259 = scmp.eq.s32.totalorder %s22, 1
    %p260 = por %p258, %p259
    %p262 = scmp.ne.s32.totalorder %s245, %s261
    %p263 = scmp.eq.s32.totalorder %s22, 0
    %p264 = por %p262, %p263
    %p265 = scmp.le.s32.totalorder 1, %s16
    %p266 = scmp.lt.s32.totalorder %s16, 3
    %p267 = pnand %p265, %p266
    %p268 = pneg %p267
    // Predicated region
    $region9: #{tpu_custom_call.1} parent=5 // pred_check
      _
    $region10: #{tpu_custom_call.1} parent=5 // pred_check_branch
      %270 = sbr.rel (%p267) target = $region12
    $region11: #{tpu_custom_call.1} parent=5 // pred_region
      %s271 = ssub.s32 %s16, 1
      // Predicated region
      $region13: #{tpu_custom_call.1} parent=11 // pred_check
        %p272 = pneg %p63
      $region14: #{tpu_custom_call.1} parent=11 // pred_check_branch
        %274 = sbr.rel (%p272) target = $region16
      $region15: #{tpu_custom_call.1} parent=11 // pred_region
        _
      $region16: #{tpu_custom_call.1} parent=11 // pred_fallthru
        _
      // Predicated region
      $region17: #{tpu_custom_call.1} parent=11 // pred_check
        %p275 = pneg %p84
      $region18: #{tpu_custom_call.1} parent=11 // pred_check_branch
        %277 = sbr.rel (%p275) target = $region20
      $region19: #{tpu_custom_call.1} parent=11 // pred_region
        _
      $region20: #{tpu_custom_call.1} parent=11 // pred_fallthru
        _
      // Predicated region
      $region21: #{tpu_custom_call.1} parent=11 // pred_check
        %p278 = pneg %p105
      $region22: #{tpu_custom_call.1} parent=11 // pred_check_branch
        %280 = sbr.rel (%p278) target = $region24
      $region23: #{tpu_custom_call.1} parent=11 // pred_region
        _
      $region24: #{tpu_custom_call.1} parent=11 // pred_fallthru
        _
      // Predicated region
      $region25: #{tpu_custom_call.1} parent=11 // pred_check
        %p281 = pneg %p126
      $region26: #{tpu_custom_call.1} parent=11 // pred_check_branch
        %283 = sbr.rel (%p281) target = $region28
      $region27: #{tpu_custom_call.1} parent=11 // pred_region
        _
      $region28: #{tpu_custom_call.1} parent=11 // pred_fallthru
        _
      // Predicated region
      $region29: #{tpu_custom_call.1} parent=11 // pred_check
        %p284 = pneg %p147
      $region30: #{tpu_custom_call.1} parent=11 // pred_check_branch
        %286 = sbr.rel (%p284) target = $region32
      $region31: #{tpu_custom_call.1} parent=11 // pred_region
        _
      $region32: #{tpu_custom_call.1} parent=11 // pred_fallthru
        _
      // Predicated region
      $region33: #{tpu_custom_call.1} parent=11 // pred_check
        %p287 = pneg %p168
      $region34: #{tpu_custom_call.1} parent=11 // pred_check_branch
        %289 = sbr.rel (%p287) target = $region36
      $region35: #{tpu_custom_call.1} parent=11 // pred_region
        _
      $region36: #{tpu_custom_call.1} parent=11 // pred_fallthru
        _
      // Predicated region
      $region37: #{tpu_custom_call.1} parent=11 // pred_check
        %p290 = pneg %p189
      $region38: #{tpu_custom_call.1} parent=11 // pred_check_branch
        %292 = sbr.rel (%p290) target = $region40
      $region39: #{tpu_custom_call.1} parent=11 // pred_region
        _
      $region40: #{tpu_custom_call.1} parent=11 // pred_fallthru
        _
      // Predicated region
      $region41: #{tpu_custom_call.1} parent=11 // pred_check
        %p293 = pneg %p210
      $region42: #{tpu_custom_call.1} parent=11 // pred_check_branch
        %295 = sbr.rel (%p293) target = $region44
      $region43: #{tpu_custom_call.1} parent=11 // pred_region
        _
      $region44: #{tpu_custom_call.1} parent=11 // pred_fallthru
        _
      // Predicated region
      $region45: #{tpu_custom_call.1} parent=11 // pred_check
        %p296 = pneg %p231
      $region46: #{tpu_custom_call.1} parent=11 // pred_check_branch
        %298 = sbr.rel (%p296) target = $region48
      $region47: #{tpu_custom_call.1} parent=11 // pred_region
        _
      $region48: #{tpu_custom_call.1} parent=11 // pred_fallthru
        _
    $region12: #{tpu_custom_call.1} parent=5 // pred_fallthru
      _
    %p299 = scmp.lt.s32.totalorder %s16, 2
    // Predicated region
    $region49: #{tpu_custom_call.1} parent=5 // pred_check
      %p300 = pneg %p299
    $region50: #{tpu_custom_call.1} parent=5 // pred_check_branch
      %302 = sbr.rel (%p300) target = $region52
    $region51: #{tpu_custom_call.1} parent=5 // pred_region
      // Predicated region
      $region53: #{tpu_custom_call.1} parent=51 // pred_check
        %p303 = pneg %p36
      $region54: #{tpu_custom_call.1} parent=51 // pred_check_branch
        %305 = sbr.rel (%p303) target = $region56
      $region55: #{tpu_custom_call.1} parent=51 // pred_region
        %p306 = scmp.lt.s32.totalorder %s16, 1
        %s307 = scalar_select %p306, %s16, 1
        %s308 = smul.addr %s307, 8
        %s309 = smul.addr %s308, 4
        %s310 = scalar_lea.vmem %s0, %s309
      $region56: #{tpu_custom_call.1} parent=51 // pred_fallthru
        _
    $region52: #{tpu_custom_call.1} parent=5 // pred_fallthru
      _
    %p311 = scmp.le.s32.totalorder 1, %s16
    %p312 = scmp.lt.s32.totalorder %s16, 3
    %p313 = pnand %p311, %p312
    %p314 = pneg %p313
    // Predicated region
    $region57: #{tpu_custom_call.1} parent=5 // pred_check
      _
    $region58: #{tpu_custom_call.1} parent=5 // pred_check_branch
      %316 = sbr.rel (%p313) target = $region60
    $region59: #{tpu_custom_call.1} parent=5 // pred_region
      %s317 = ssub.s32 %s16, 1
      %p318 = scmp.lt.s32.totalorder %s21, 1
      %s319 = scalar_select %p318, %s21, 1
      %s320 = smul.addr %s319, 8
      %s321 = smul.addr %s320, 4
      %s322 = scalar_lea.vmem %s0, %s321
      %p323 = pneg %p42
      %p324 = pneg %p39
      %p325 = pneg %p63
      %p326 = pneg %p60
      %p327 = pneg %p84
      %p328 = pneg %p81
      %p329 = pneg %p105
      %p330 = pneg %p102
      %p331 = pneg %p126
      %p332 = pneg %p123
      %p333 = pneg %p147
      %p334 = pneg %p144
      %p335 = pneg %p168
      %p336 = pneg %p165
      %p337 = pneg %p189
      %p338 = pneg %p186
      %p339 = pneg %p210
      %p340 = pneg %p207
      %p341 = pneg %p231
      %p342 = pneg %p228
      %p343 = pneg %p257
      %p344 = pneg %p254
      %p345 = scmp.lt.s32.totalorder %s21, 1
      %s346 = scalar_select %p345, %s21, 1
      %s347 = smul.addr %s346, 8
      %s348 = smul.addr %s347, 4
      %s349 = scalar_lea.vmem %s10, %s348
      %p350 = scmp.lt.s32.totalorder %s21, 1
      %s351 = scalar_select %p350, %s21, 1
      %s352 = smul.addr %s351, 8
      %s353 = smul.addr %s352, 4
      %s354 = scalar_lea.vmem %s0, %s353
      %p355 = scmp.lt.s32.totalorder %s21, 1
      %s356 = scalar_select %p355, %s21, 1
      %s357 = smul.addr %s356, 8
      %s358 = smul.addr %s357, 4
      %s359 = scalar_lea.vmem %s10, %s358
      %vm361 = vcmask 27648
      %362 = vst.msk [vmem:[#allocation2] sm:$0xf] %vm361, 0
      %vm363 = vcmask 24576
      %364 = vst.msk [vmem:[#allocation2 + $0x4] sm:$0x1] %vm363, 0
      %s365 = scalar_lea.vmem [#allocation2], 72
      %366 = vst.msk [vmem:[%s365] sm:$0xf] %vm361, 0
      %367 = vst.msk [vmem:[%s365 + $0x4] sm:$0x1] %vm363, 0
      %vm368 = vcmask 24576
      %vm369 = vsmask.f32 256
      %vm370 = vmand %vm368, %vm369
      %v371 = vld [vmem:[#allocation2] sm:$0x1]
      %v372 = vsel %vm370, 0, %v371
      %373 = vst [vmem:[#allocation2] sm:$0x1] %v372
      %v374 = vld [vmem:[#allocation2 + $0x8] sm:$0x1]
      %v375 = vsel %vm370, 0, %v374
      %376 = vst [vmem:[#allocation2 + $0x8] sm:$0x1] %v375
      %v377 = vld [vmem:[#allocation2 + $0x10] sm:$0x1]
      %v378 = vsel %vm370, 0, %v377
      %379 = vst [vmem:[#allocation2 + $0x10] sm:$0x1] %v378
      %v380 = vld [vmem:[#allocation2 + $0x18] sm:$0x1]
      %v381 = vsel %vm370, 0, %v380
      %382 = vst [vmem:[#allocation2 + $0x18] sm:$0x1] %v381
      %v383 = vld [vmem:[#allocation2 + $0x20] sm:$0x1]
      %v384 = vsel %vm370, 0, %v383
      %385 = vst [vmem:[#allocation2 + $0x20] sm:$0x1] %v384
      %v386 = vld [vmem:[#allocation2 + $0x28] sm:$0x1]
      %v387 = vsel %vm370, 0, %v386
      %388 = vst [vmem:[#allocation2 + $0x28] sm:$0x1] %v387
      %v389 = vld [vmem:[#allocation2 + $0x30] sm:$0x1]
      %v390 = vsel %vm370, 0, %v389
      %391 = vst [vmem:[#allocation2 + $0x30] sm:$0x1] %v390
      %v392 = vld [vmem:[#allocation2 + $0x38] sm:$0x1]
      %v393 = vsel %vm370, 0, %v392
      %394 = vst [vmem:[#allocation2 + $0x38] sm:$0x1] %v393
      %v395 = vld [vmem:[#allocation2 + $0x40] sm:$0x1]
      %v396 = vsel %vm370, 0, %v395
      %397 = vst [vmem:[#allocation2 + $0x40] sm:$0x1] %v396
      %v398 = vld [vmem:[#allocation2 + $0x48] sm:$0x1]
      %v399 = vsel %vm370, 0, %v398
      %400 = vst [vmem:[#allocation2 + $0x48] sm:$0x1] %v399
      %vm401 = vsmask.f32 7938
      %vm402 = vmand %vm368, %vm401
      %v403 = vld [vmem:[#allocation2 + $0x4] sm:$0x1]
      %v404 = vsel %vm402, 0, %v403
      %405 = vst [vmem:[#allocation2 + $0x4] sm:$0x1] %v404
      %v406 = vld [vmem:[#allocation2 + $0xc] sm:$0x1]
      %v407 = vsel %vm402, 0, %v406
      %408 = vst [vmem:[#allocation2 + $0xc] sm:$0x1] %v407
      %v409 = vld [vmem:[#allocation2 + $0x14] sm:$0x1]
      %v410 = vsel %vm402, 0, %v409
      %411 = vst [vmem:[#allocation2 + $0x14] sm:$0x1] %v410
      %v412 = vld [vmem:[#allocation2 + $0x1c] sm:$0x1]
      %v413 = vsel %vm402, 0, %v412
      %414 = vst [vmem:[#allocation2 + $0x1c] sm:$0x1] %v413
      %v415 = vld [vmem:[#allocation2 + $0x24] sm:$0x1]
      %v416 = vsel %vm402, 0, %v415
      %417 = vst [vmem:[#allocation2 + $0x24] sm:$0x1] %v416
      %v418 = vld [vmem:[#allocation2 + $0x2c] sm:$0x1]
      %v419 = vsel %vm402, 0, %v418
      %420 = vst [vmem:[#allocation2 + $0x2c] sm:$0x1] %v419
      %v421 = vld [vmem:[#allocation2 + $0x34] sm:$0x1]
      %v422 = vsel %vm402, 0, %v421
      %423 = vst [vmem:[#allocation2 + $0x34] sm:$0x1] %v422
      %v424 = vld [vmem:[#allocation2 + $0x3c] sm:$0x1]
      %v425 = vsel %vm402, 0, %v424
      %426 = vst [vmem:[#allocation2 + $0x3c] sm:$0x1] %v425
      %v427 = vld [vmem:[#allocation2 + $0x44] sm:$0x1]
      %v428 = vsel %vm402, 0, %v427
      %429 = vst [vmem:[#allocation2 + $0x44] sm:$0x1] %v428
      %v430 = vld [vmem:[#allocation2 + $0x4c] sm:$0x1]
      %v431 = vsel %vm402, 0, %v430
      %432 = vst [vmem:[#allocation2 + $0x4c] sm:$0x1] %v431
      %v433 = vld [vmem:[%s354] sm:$0xf]
      %v434 = vld [vmem:[%s354 + $0x4] sm:$0xf]
      %v435 = vld [vmem:[%s354 + $0x8] sm:$0xf]
      %v436 = vld [vmem:[%s354 + $0xc] sm:$0xf]
      %v437 = vld [vmem:[%s354 + $0x10] sm:$0xf]
      %v438 = vld [vmem:[%s354 + $0x14] sm:$0xf]
      %v439 = vld [vmem:[%s354 + $0x18] sm:$0xf]
      %v440 = vld [vmem:[%s354 + $0x1c] sm:$0xf]
      %v441 = vld [vmem:[%s1] sm:$0xf]
      %v442 = vld [vmem:[%s1 + $0x4] sm:$0xf]
      %v451 = vunpack.c.l.b16 %v433
      %v452 = vunpack.c.l.b16 %v434
      %v453 = vunpack.c.l.b16 %v435
      %v454 = vunpack.c.l.b16 %v436
      %v455 = vunpack.c.l.b16 %v437
      %v456 = vunpack.c.l.b16 %v438
      %v457 = vunpack.c.l.b16 %v439
      %v458 = vunpack.c.l.b16 %v440
      %v459 = vpack.c.b16 %v452, %v451
      %v460 = vpack.c.b16 %v454, %v453
      %v461 = vpack.c.b16 %v456, %v455
      %v462 = vpack.c.b16 %v458, %v457
      %v465 = vunpack.c.l.b16 %v441
      %v466 = vunpack.c.l.b16 %v442
      %v467 = vpack.c.b16 %v466, %v465
      %vm469 = vcmask 130048
      %v471 = vsel %vm469, %v459, 0
      %v474 = vsel %vm469, %v460, 0
      %v477 = vsel %vm469, %v461, 0
      %v480 = vsel %vm469, %v462, 0
      %482 = vmatpush.bf16.msra.mxu0 0
      %483 = vmatpush.bf16.msra.mxu0 0
      %484 = vmatpush.bf16.msra.mxu0 0
      %485 = vmatpush.bf16.msra.mxu0 0
      %486 = vmatpush.bf16.msra.mxu0 0
      %487 = vmatpush.bf16.msra.mxu0 0
      %488 = vmatpush.bf16.msra.mxu0 0
      %489 = vmatpush.bf16.msra.mxu0 %v467
      %490 = vmatmul.bf16.gmra.mxu0 %v471
      %v491 = vpop.f32.mrf.mxu0
      %v492 = vadd.f32 0.0, %v491
      %v493 = vpop.f32.mrf.mxu0
      %v494 = vadd.f32 0.0, %v493
      %495 = vmatmul.bf16.gmra.mxu0 %v474
      %v496 = vpop.f32.mrf.mxu0
      %v497 = vadd.f32 0.0, %v496
      %v498 = vpop.f32.mrf.mxu0
      %v499 = vadd.f32 0.0, %v498
      %500 = vmatmul.bf16.gmra.mxu0 %v477
      %v501 = vpop.f32.mrf.mxu0
      %v502 = vadd.f32 0.0, %v501
      %v503 = vpop.f32.mrf.mxu0
      %v504 = vadd.f32 0.0, %v503
      %505 = vmatmul.bf16.gmra.mxu0 %v480
      %v506 = vpop.f32.mrf.mxu0
      %v507 = vadd.f32 0.0, %v506
      %v508 = vpop.f32.mrf.mxu0
      %v509 = vadd.f32 0.0, %v508
      %510 = vdwg.mxu0
      %v511 = vld [vmem:[%s2] sm:$0x1]
      %v513 = vperm.slane %v511, 0
      %v515 = vmul.f32 %v492, %v513
      %v516 = vmul.f32 %v494, %v513
      %v517 = vmul.f32 %v497, %v513
      %v518 = vmul.f32 %v499, %v513
      %v519 = vmul.f32 %v502, %v513
      %v520 = vmul.f32 %v504, %v513
      %v521 = vmul.f32 %v507, %v513
      %v522 = vmul.f32 %v509, %v513
      %v523 = vld [vmem:[%s3] sm:$0x1]
      %v525 = vperm.slane %v523, 0
      %v527 = vadd.f32 %v515, %v525
      %v528 = vadd.f32 %v516, %v525
      %v529 = vadd.f32 %v517, %v525
      %v530 = vadd.f32 %v518, %v525
      %v531 = vadd.f32 %v519, %v525
      %v532 = vadd.f32 %v520, %v525
      %v533 = vadd.f32 %v521, %v525
      %v534 = vadd.f32 %v522, %v525
      %v535 = vmax.f32 %v527, 0.0
      %v536 = vmax.f32 %v528, 0.0
      %v537 = vmax.f32 %v529, 0.0
      %v538 = vmax.f32 %v530, 0.0
      %v539 = vmax.f32 %v531, 0.0
      %v540 = vmax.f32 %v532, 0.0
      %v541 = vmax.f32 %v533, 0.0
      %v542 = vmax.f32 %v534, 0.0
      %v543 = vpack.c.bf16 %v535, %v535
      %v544 = vpack.c.bf16 %v536, %v536
      %v545 = vpack.c.bf16 %v537, %v537
      %v546 = vpack.c.bf16 %v538, %v538
      %v547 = vpack.c.bf16 %v539, %v539
      %v548 = vpack.c.bf16 %v540, %v540
      %v549 = vpack.c.bf16 %v541, %v541
      %v550 = vpack.c.bf16 %v542, %v542
      %v552 = vshrl.u32 %v543, 16
      %v554 = vrot.slane %v552, 7
      %v555 = vshll.u32 %v543, 16
      %v557 = vor.u32 %v554, %v555
      %v558 = vrot.slane %v554, 4
      %v560 = vshrl.u32 %v544, 16
      %v562 = vrot.slane %v560, 7
      %v563 = vshll.u32 %v544, 16
      %v565 = vor.u32 %v562, %v563
      %v566 = vrot.slane %v562, 4
      %v568 = vshrl.u32 %v545, 16
      %v570 = vrot.slane %v568, 7
      %v571 = vshll.u32 %v545, 16
      %v573 = vor.u32 %v570, %v571
      %v574 = vrot.slane %v570, 4
      %v576 = vshrl.u32 %v546, 16
      %v578 = vrot.slane %v576, 7
      %v579 = vshll.u32 %v546, 16
      %v581 = vor.u32 %v578, %v579
      %v582 = vrot.slane %v578, 4
      %v584 = vshrl.u32 %v547, 16
      %v586 = vrot.slane %v584, 7
      %v587 = vshll.u32 %v547, 16
      %v589 = vor.u32 %v586, %v587
      %v590 = vrot.slane %v586, 4
      %v592 = vshrl.u32 %v548, 16
      %v594 = vrot.slane %v592, 7
      %v595 = vshll.u32 %v548, 16
      %v597 = vor.u32 %v594, %v595
      %v598 = vrot.slane %v594, 4
      %v600 = vshrl.u32 %v549, 16
      %v602 = vrot.slane %v600, 7
      %v603 = vshll.u32 %v549, 16
      %v605 = vor.u32 %v602, %v603
      %v606 = vrot.slane %v602, 4
      %v608 = vshrl.u32 %v550, 16
      %v610 = vrot.slane %v608, 7
      %v611 = vshll.u32 %v550, 16
      %v613 = vor.u32 %v610, %v611
      %v614 = vrot.slane %v610, 4
      %s631 = scalar_lea.vmem [#allocation2], 8
      %vm632 = vcmask 27648
      %vm633 = vmand %vm632, %vm401
      %v634 = vld [vmem:[%s631] sm:$0xf]
      %v635 = vsel %vm633, %v557, %v634
      %636 = vst [vmem:[%s631] sm:$0xf] %v635
      %v637 = vld [vmem:[%s631 + $0x4] sm:$0x1]
      %v638 = vsel %vm370, %v558, %v637
      %639 = vst [vmem:[%s631 + $0x4] sm:$0x1] %v638
      %v640 = vld [vmem:[%s631 + $0x8] sm:$0xf]
      %v641 = vsel %vm633, %v565, %v640
      %642 = vst [vmem:[%s631 + $0x8] sm:$0xf] %v641
      %v643 = vld [vmem:[%s631 + $0xc] sm:$0x1]
      %v644 = vsel %vm370, %v566, %v643
      %645 = vst [vmem:[%s631 + $0xc] sm:$0x1] %v644
      %v646 = vld [vmem:[%s631 + $0x10] sm:$0xf]
      %v647 = vsel %vm633, %v573, %v646
      %648 = vst [vmem:[%s631 + $0x10] sm:$0xf] %v647
      %v649 = vld [vmem:[%s631 + $0x14] sm:$0x1]
      %v650 = vsel %vm370, %v574, %v649
      %651 = vst [vmem:[%s631 + $0x14] sm:$0x1] %v650
      %v652 = vld [vmem:[%s631 + $0x18] sm:$0xf]
      %v653 = vsel %vm633, %v581, %v652
      %654 = vst [vmem:[%s631 + $0x18] sm:$0xf] %v653
      %v655 = vld [vmem:[%s631 + $0x1c] sm:$0x1]
      %v656 = vsel %vm370, %v582, %v655
      %657 = vst [vmem:[%s631 + $0x1c] sm:$0x1] %v656
      %v658 = vld [vmem:[%s631 + $0x20] sm:$0xf]
      %v659 = vsel %vm633, %v589, %v658
      %660 = vst [vmem:[%s631 + $0x20] sm:$0xf] %v659
      %v661 = vld [vmem:[%s631 + $0x24] sm:$0x1]
      %v662 = vsel %vm370, %v590, %v661
      %663 = vst [vmem:[%s631 + $0x24] sm:$0x1] %v662
      %v664 = vld [vmem:[%s631 + $0x28] sm:$0xf]
      %v665 = vsel %vm633, %v597, %v664
      %666 = vst [vmem:[%s631 + $0x28] sm:$0xf] %v665
      %v667 = vld [vmem:[%s631 + $0x2c] sm:$0x1]
      %v668 = vsel %vm370, %v598, %v667
      %669 = vst [vmem:[%s631 + $0x2c] sm:$0x1] %v668
      %v670 = vld [vmem:[%s631 + $0x30] sm:$0xf]
      %v671 = vsel %vm633, %v605, %v670
      %672 = vst [vmem:[%s631 + $0x30] sm:$0xf] %v671
      %v673 = vld [vmem:[%s631 + $0x34] sm:$0x1]
      %v674 = vsel %vm370, %v606, %v673
      %675 = vst [vmem:[%s631 + $0x34] sm:$0x1] %v674
      %v676 = vld [vmem:[%s631 + $0x38] sm:$0xf]
      %v677 = vsel %vm633, %v613, %v676
      %678 = vst [vmem:[%s631 + $0x38] sm:$0xf] %v677
      %v679 = vld [vmem:[%s631 + $0x3c] sm:$0x1]
      %v680 = vsel %vm370, %v614, %v679
      %681 = vst [vmem:[%s631 + $0x3c] sm:$0x1] %v680
      %v682 = vld [vmem:[#allocation2] sm:$0xf]
      %v683 = vld [vmem:[#allocation2 + $0x8] sm:$0xf]
      %v684 = vld [vmem:[#allocation2 + $0x10] sm:$0xf]
      %v685 = vld [vmem:[#allocation2 + $0x18] sm:$0xf]
      %v686 = vld [vmem:[#allocation2 + $0x20] sm:$0xf]
      %v687 = vld [vmem:[#allocation2 + $0x28] sm:$0xf]
      %v688 = vld [vmem:[#allocation2 + $0x30] sm:$0xf]
      %v689 = vld [vmem:[#allocation2 + $0x38] sm:$0xf]
      %v690 = vld [vmem:[%s4] sm:$0x3]
      %v699 = vunpack.c.l.b16 %v682
      %v700 = vunpack.c.l.b16 %v683
      %v701 = vunpack.c.l.b16 %v684
      %v702 = vunpack.c.l.b16 %v685
      %v703 = vunpack.c.l.b16 %v686
      %v704 = vunpack.c.l.b16 %v687
      %v705 = vunpack.c.l.b16 %v688
      %v706 = vunpack.c.l.b16 %v689
      %v707 = vpack.c.b16 %v700, %v699
      %v708 = vpack.c.b16 %v702, %v701
      %v709 = vpack.c.b16 %v704, %v703
      %v710 = vpack.c.b16 %v706, %v705
      %vm711 = vcmask 31744
      %v713 = vsel %vm711, %v707, 0
      %v716 = vsel %vm711, %v708, 0
      %v719 = vsel %vm711, %v709, 0
      %v722 = vsel %vm711, %v710, 0
      %vm724 = vcmask 1041408
      %v726 = vsel %vm724, %v690, 0
      %728 = vmatpush.bf16.msra.mxu0 0
      %729 = vmatpush.bf16.msra.mxu0 0
      %730 = vmatpush.bf16.msra.mxu0 0
      %731 = vmatpush.bf16.msra.mxu0 0
      %732 = vmatpush.bf16.msra.mxu0 0
      %733 = vmatpush.bf16.msra.mxu0 0
      %734 = vmatpush.bf16.msra.mxu0 0
      %735 = vmatpush.bf16.msra.mxu0 %v726
      %736 = vmatmul.bf16.gmra.mxu0 %v713
      %v737 = vpop.f32.mrf.mxu0
      %v738 = vadd.f32 0.0, %v737
      %v739 = vpop.f32.mrf.mxu0
      %v740 = vadd.f32 0.0, %v739
      %741 = vmatmul.bf16.gmra.mxu0 %v716
      %v742 = vpop.f32.mrf.mxu0
      %v743 = vadd.f32 0.0, %v742
      %v744 = vpop.f32.mrf.mxu0
      %v745 = vadd.f32 0.0, %v744
      %746 = vmatmul.bf16.gmra.mxu0 %v719
      %v747 = vpop.f32.mrf.mxu0
      %v748 = vadd.f32 0.0, %v747
      %v749 = vpop.f32.mrf.mxu0
      %v750 = vadd.f32 0.0, %v749
      %751 = vmatmul.bf16.gmra.mxu0 %v722
      %v752 = vpop.f32.mrf.mxu0
      %v753 = vadd.f32 0.0, %v752
      %v754 = vpop.f32.mrf.mxu0
      %v755 = vadd.f32 0.0, %v754
      %756 = vdwg.mxu0
      %757 = vst.msk [vmem:[#allocation3] sm:$0xff] %vm711, %v738
      %758 = vst.msk [vmem:[#allocation3 + $0x8] sm:$0xff] %vm711, %v740
      %759 = vst.msk [vmem:[#allocation3 + $0x10] sm:$0xff] %vm711, %v743
      %760 = vst.msk [vmem:[#allocation3 + $0x18] sm:$0xff] %vm711, %v745
      %761 = vst.msk [vmem:[#allocation3 + $0x20] sm:$0xff] %vm711, %v748
      %762 = vst.msk [vmem:[#allocation3 + $0x28] sm:$0xff] %vm711, %v750
      %763 = vst.msk [vmem:[#allocation3 + $0x30] sm:$0xff] %vm711, %v753
      %764 = vst.msk [vmem:[#allocation3 + $0x38] sm:$0xff] %vm711, %v755
      %v765 = vld [vmem:[#allocation2] sm:$0xf]
      %v766 = vld [vmem:[#allocation2 + $0x4] sm:$0x1]
      %v767 = vld [vmem:[#allocation2 + $0x8] sm:$0xf]
      %v768 = vld [vmem:[#allocation2 + $0xc] sm:$0x1]
      %v769 = vld [vmem:[#allocation2 + $0x10] sm:$0xf]
      %v770 = vld [vmem:[#allocation2 + $0x14] sm:$0x1]
      %v771 = vld [vmem:[#allocation2 + $0x18] sm:$0xf]
      %v772 = vld [vmem:[#allocation2 + $0x1c] sm:$0x1]
      %v773 = vld [vmem:[#allocation2 + $0x20] sm:$0xf]
      %v774 = vld [vmem:[#allocation2 + $0x24] sm:$0x1]
      %v775 = vld [vmem:[#allocation2 + $0x28] sm:$0xf]
      %v776 = vld [vmem:[#allocation2 + $0x2c] sm:$0x1]
      %v777 = vld [vmem:[#allocation2 + $0x30] sm:$0xf]
      %v778 = vld [vmem:[#allocation2 + $0x34] sm:$0x1]
      %v779 = vld [vmem:[#allocation2 + $0x38] sm:$0xf]
      %v780 = vld [vmem:[#allocation2 + $0x3c] sm:$0x1]
      %vm781 = vsmask.f32 3328
      %vm782 = vsmask.f32 7440
      %vm783 = vmor %vm781, %vm782
      %v785 = vshrl.u32 %v765, 16
      %v787 = vrot.slane %v785, 4
      %v788 = vshll.u32 %v765, 16
      %v790 = vrot.slane %v788, 5
      %v791 = vor.u32 %v787, %v790
      %v792 = vrot.slane %v791, 4
      %v794 = vshll.u32 %v766, 16
      %v796 = vrot.slane %v794, 5
      %v797 = vsel %vm783, %v792, %v796
      %v799 = vshrl.u32 %v767, 16
      %v801 = vrot.slane %v799, 4
      %v802 = vshll.u32 %v767, 16
      %v804 = vrot.slane %v802, 5
      %v805 = vor.u32 %v801, %v804
      %v806 = vrot.slane %v805, 4
      %v808 = vshll.u32 %v768, 16
      %v810 = vrot.slane %v808, 5
      %v811 = vsel %vm783, %v806, %v810
      %v813 = vshrl.u32 %v769, 16
      %v815 = vrot.slane %v813, 4
      %v816 = vshll.u32 %v769, 16
      %v818 = vrot.slane %v816, 5
      %v819 = vor.u32 %v815, %v818
      %v820 = vrot.slane %v819, 4
      %v822 = vshll.u32 %v770, 16
      %v824 = vrot.slane %v822, 5
      %v825 = vsel %vm783, %v820, %v824
      %v827 = vshrl.u32 %v771, 16
      %v829 = vrot.slane %v827, 4
      %v830 = vshll.u32 %v771, 16
      %v832 = vrot.slane %v830, 5
      %v833 = vor.u32 %v829, %v832
      %v834 = vrot.slane %v833, 4
      %v836 = vshll.u32 %v772, 16
      %v838 = vrot.slane %v836, 5
      %v839 = vsel %vm783, %v834, %v838
      %v841 = vshrl.u32 %v773, 16
      %v843 = vrot.slane %v841, 4
      %v844 = vshll.u32 %v773, 16
      %v846 = vrot.slane %v844, 5
      %v847 = vor.u32 %v843, %v846
      %v848 = vrot.slane %v847, 4
      %v850 = vshll.u32 %v774, 16
      %v852 = vrot.slane %v850, 5
      %v853 = vsel %vm783, %v848, %v852
      %v855 = vshrl.u32 %v775, 16
      %v857 = vrot.slane %v855, 4
      %v858 = vshll.u32 %v775, 16
      %v860 = vrot.slane %v858, 5
      %v861 = vor.u32 %v857, %v860
      %v862 = vrot.slane %v861, 4
      %v864 = vshll.u32 %v776, 16
      %v866 = vrot.slane %v864, 5
      %v867 = vsel %vm783, %v862, %v866
      %v869 = vshrl.u32 %v777, 16
      %v871 = vrot.slane %v869, 4
      %v872 = vshll.u32 %v777, 16
      %v874 = vrot.slane %v872, 5
      %v875 = vor.u32 %v871, %v874
      %v876 = vrot.slane %v875, 4
      %v878 = vshll.u32 %v778, 16
      %v880 = vrot.slane %v878, 5
      %v881 = vsel %vm783, %v876, %v880
      %v883 = vshrl.u32 %v779, 16
      %v885 = vrot.slane %v883, 4
      %v886 = vshll.u32 %v779, 16
      %v888 = vrot.slane %v886, 5
      %v889 = vor.u32 %v885, %v888
      %v890 = vrot.slane %v889, 4
      %v892 = vshll.u32 %v780, 16
      %v894 = vrot.slane %v892, 5
      %v895 = vsel %vm783, %v890, %v894
      %s896 = scalar_lea.vmem %s4, 2
      %v897 = vld [vmem:[%s896] sm:$0x3]
      %v898 = vunpack.c.l.b16 %v797
      %v899 = vunpack.c.l.b16 %v811
      %v900 = vunpack.c.l.b16 %v825
      %v901 = vunpack.c.l.b16 %v839
      %v902 = vunpack.c.l.b16 %v853
      %v903 = vunpack.c.l.b16 %v867
      %v904 = vunpack.c.l.b16 %v881
      %v905 = vunpack.c.l.b16 %v895
      %v906 = vpack.c.b16 %v899, %v898
      %v907 = vpack.c.b16 %v901, %v900
      %v908 = vpack.c.b16 %v903, %v902
      %v909 = vpack.c.b16 %v905, %v904
      %v911 = vsel %vm711, %v906, 0
      %v914 = vsel %vm711, %v907, 0
      %v917 = vsel %vm711, %v908, 0
      %v920 = vsel %vm711, %v909, 0
      %v923 = vsel %vm724, %v897, 0
      %925 = vmatpush.bf16.msra.mxu0 0
      %926 = vmatpush.bf16.msra.mxu0 0
      %927 = vmatpush.bf16.msra.mxu0 0
      %928 = vmatpush.bf16.msra.mxu0 0
      %929 = vmatpush.bf16.msra.mxu0 0
      %930 = vmatpush.bf16.msra.mxu0 0
      %931 = vmatpush.bf16.msra.mxu0 0
      %932 = vmatpush.bf16.msra.mxu0 %v923
      %933 = vmatmul.bf16.gmra.mxu0 %v911
      %v934 = vpop.f32.mrf.mxu0
      %v935 = vadd.f32 0.0, %v934
      %v936 = vpop.f32.mrf.mxu0
      %v937 = vadd.f32 0.0, %v936
      %938 = vmatmul.bf16.gmra.mxu0 %v914
      %v939 = vpop.f32.mrf.mxu0
      %v940 = vadd.f32 0.0, %v939
      %v941 = vpop.f32.mrf.mxu0
      %v942 = vadd.f32 0.0, %v941
      %943 = vmatmul.bf16.gmra.mxu0 %v917
      %v944 = vpop.f32.mrf.mxu0
      %v945 = vadd.f32 0.0, %v944
      %v946 = vpop.f32.mrf.mxu0
      %v947 = vadd.f32 0.0, %v946
      %948 = vmatmul.bf16.gmra.mxu0 %v920
      %v949 = vpop.f32.mrf.mxu0
      %v950 = vadd.f32 0.0, %v949
      %v951 = vpop.f32.mrf.mxu0
      %v952 = vadd.f32 0.0, %v951
      %953 = vdwg.mxu0
      %v954 = vld [vmem:[#allocation3] sm:$0xff]
      %v955 = vld [vmem:[#allocation3 + $0x8] sm:$0xff]
      %v956 = vld [vmem:[#allocation3 + $0x10] sm:$0xff]
      %v957 = vld [vmem:[#allocation3 + $0x18] sm:$0xff]
      %v958 = vld [vmem:[#allocation3 + $0x20] sm:$0xff]
      %v959 = vld [vmem:[#allocation3 + $0x28] sm:$0xff]
      %v960 = vld [vmem:[#allocation3 + $0x30] sm:$0xff]
      %v961 = vld [vmem:[#allocation3 + $0x38] sm:$0xff]
      %v962 = vadd.f32 %v954, %v935
      %v963 = vadd.f32 %v955, %v937
      %v964 = vadd.f32 %v956, %v940
      %v965 = vadd.f32 %v957, %v942
      %v966 = vadd.f32 %v958, %v945
      %v967 = vadd.f32 %v959, %v947
      %v968 = vadd.f32 %v960, %v950
      %v969 = vadd.f32 %v961, %v952
      %970 = vst.msk [vmem:[#allocation3] sm:$0xff] %vm711, %v962
      %971 = vst.msk [vmem:[#allocation3 + $0x8] sm:$0xff] %vm711, %v963
      %972 = vst.msk [vmem:[#allocation3 + $0x10] sm:$0xff] %vm711, %v964
      %973 = vst.msk [vmem:[#allocation3 + $0x18] sm:$0xff] %vm711, %v965
      %974 = vst.msk [vmem:[#allocation3 + $0x20] sm:$0xff] %vm711, %v966
      %975 = vst.msk [vmem:[#allocation3 + $0x28] sm:$0xff] %vm711, %v967
      %976 = vst.msk [vmem:[#allocation3 + $0x30] sm:$0xff] %vm711, %v968
      %977 = vst.msk [vmem:[#allocation3 + $0x38] sm:$0xff] %vm711, %v969
      %v978 = vld [vmem:[#allocation2] sm:$0xe]
      %v979 = vld [vmem:[#allocation2 + $0x4] sm:$0x1]
      %v980 = vld [vmem:[#allocation2 + $0x8] sm:$0xe]
      %v981 = vld [vmem:[#allocation2 + $0xc] sm:$0x1]
      %v982 = vld [vmem:[#allocation2 + $0x10] sm:$0xe]
      %v983 = vld [vmem:[#allocation2 + $0x14] sm:$0x1]
      %v984 = vld [vmem:[#allocation2 + $0x18] sm:$0xe]
      %v985 = vld [vmem:[#allocation2 + $0x1c] sm:$0x1]
      %v986 = vld [vmem:[#allocation2 + $0x20] sm:$0xe]
      %v987 = vld [vmem:[#allocation2 + $0x24] sm:$0x1]
      %v988 = vld [vmem:[#allocation2 + $0x28] sm:$0xe]
      %v989 = vld [vmem:[#allocation2 + $0x2c] sm:$0x1]
      %v990 = vld [vmem:[#allocation2 + $0x30] sm:$0xe]
      %v991 = vld [vmem:[#allocation2 + $0x34] sm:$0x1]
      %v992 = vld [vmem:[#allocation2 + $0x38] sm:$0xe]
      %v993 = vld [vmem:[#allocation2 + $0x3c] sm:$0x1]
      %vm1010 = vcmask 1042432
      %vm1011 = vcmask 1046532
      %vm1012 = vmor %vm1010, %vm1011
      %v1013 = vrot.slane %v978, 5
      %v1014 = vrot.slane %v1013, 4
      %v1015 = vrot.slane %v979, 5
      %v1016 = vsel %vm1012, %v1014, %v1015
      %v1017 = vrot.slane %v980, 5
      %v1018 = vrot.slane %v1017, 4
      %v1019 = vrot.slane %v981, 5
      %v1020 = vsel %vm1012, %v1018, %v1019
      %v1021 = vrot.slane %v982, 5
      %v1022 = vrot.slane %v1021, 4
      %v1023 = vrot.slane %v983, 5
      %v1024 = vsel %vm1012, %v1022, %v1023
      %v1025 = vrot.slane %v984, 5
      %v1026 = vrot.slane %v1025, 4
      %v1027 = vrot.slane %v985, 5
      %v1028 = vsel %vm1012, %v1026, %v1027
      %v1029 = vrot.slane %v986, 5
      %v1030 = vrot.slane %v1029, 4
      %v1031 = vrot.slane %v987, 5
      %v1032 = vsel %vm1012, %v1030, %v1031
      %v1033 = vrot.slane %v988, 5
      %v1034 = vrot.slane %v1033, 4
      %v1035 = vrot.slane %v989, 5
      %v1036 = vsel %vm1012, %v1034, %v1035
      %v1037 = vrot.slane %v990, 5
      %v1038 = vrot.slane %v1037, 4
      %v1039 = vrot.slane %v991, 5
      %v1040 = vsel %vm1012, %v1038, %v1039
      %v1041 = vrot.slane %v992, 5
      %v1042 = vrot.slane %v1041, 4
      %v1043 = vrot.slane %v993, 5
      %v1044 = vsel %vm1012, %v1042, %v1043
      %s1045 = scalar_lea.vmem %s4, 4
      %v1046 = vld [vmem:[%s1045] sm:$0x3]
      %v1047 = vunpack.c.l.b16 %v1016
      %v1048 = vunpack.c.l.b16 %v1020
      %v1049 = vunpack.c.l.b16 %v1024
      %v1050 = vunpack.c.l.b16 %v1028
      %v1051 = vunpack.c.l.b16 %v1032
      %v1052 = vunpack.c.l.b16 %v1036
      %v1053 = vunpack.c.l.b16 %v1040
      %v1054 = vunpack.c.l.b16 %v1044
      %v1055 = vpack.c.b16 %v1048, %v1047
      %v1056 = vpack.c.b16 %v1050, %v1049
      %v1057 = vpack.c.b16 %v1052, %v1051
      %v1058 = vpack.c.b16 %v1054, %v1053
      %v1060 = vsel %vm711, %v1055, 0
      %v1063 = vsel %vm711, %v1056, 0
      %v1066 = vsel %vm711, %v1057, 0
      %v1069 = vsel %vm711, %v1058, 0
      %v1072 = vsel %vm724, %v1046, 0
      %1074 = vmatpush.bf16.msra.mxu0 0
      %1075 = vmatpush.bf16.msra.mxu0 0
      %1076 = vmatpush.bf16.msra.mxu0 0
      %1077 = vmatpush.bf16.msra.mxu0 0
      %1078 = vmatpush.bf16.msra.mxu0 0
      %1079 = vmatpush.bf16.msra.mxu0 0
      %1080 = vmatpush.bf16.msra.mxu0 0
      %1081 = vmatpush.bf16.msra.mxu0 %v1072
      %1082 = vmatmul.bf16.gmra.mxu0 %v1060
      %v1083 = vpop.f32.mrf.mxu0
      %v1084 = vadd.f32 0.0, %v1083
      %v1085 = vpop.f32.mrf.mxu0
      %v1086 = vadd.f32 0.0, %v1085
      %1087 = vmatmul.bf16.gmra.mxu0 %v1063
      %v1088 = vpop.f32.mrf.mxu0
      %v1089 = vadd.f32 0.0, %v1088
      %v1090 = vpop.f32.mrf.mxu0
      %v1091 = vadd.f32 0.0, %v1090
      %1092 = vmatmul.bf16.gmra.mxu0 %v1066
      %v1093 = vpop.f32.mrf.mxu0
      %v1094 = vadd.f32 0.0, %v1093
      %v1095 = vpop.f32.mrf.mxu0
      %v1096 = vadd.f32 0.0, %v1095
      %1097 = vmatmul.bf16.gmra.mxu0 %v1069
      %v1098 = vpop.f32.mrf.mxu0
      %v1099 = vadd.f32 0.0, %v1098
      %v1100 = vpop.f32.mrf.mxu0
      %v1101 = vadd.f32 0.0, %v1100
      %1102 = vdwg.mxu0
      %v1103 = vld [vmem:[#allocation3] sm:$0xff]
      %v1104 = vld [vmem:[#allocation3 + $0x8] sm:$0xff]
      %v1105 = vld [vmem:[#allocation3 + $0x10] sm:$0xff]
      %v1106 = vld [vmem:[#allocation3 + $0x18] sm:$0xff]
      %v1107 = vld [vmem:[#allocation3 + $0x20] sm:$0xff]
      %v1108 = vld [vmem:[#allocation3 + $0x28] sm:$0xff]
      %v1109 = vld [vmem:[#allocation3 + $0x30] sm:$0xff]
      %v1110 = vld [vmem:[#allocation3 + $0x38] sm:$0xff]
      %v1111 = vadd.f32 %v1103, %v1084
      %v1112 = vadd.f32 %v1104, %v1086
      %v1113 = vadd.f32 %v1105, %v1089
      %v1114 = vadd.f32 %v1106, %v1091
      %v1115 = vadd.f32 %v1107, %v1094
      %v1116 = vadd.f32 %v1108, %v1096
      %v1117 = vadd.f32 %v1109, %v1099
      %v1118 = vadd.f32 %v1110, %v1101
      %1119 = vst.msk [vmem:[#allocation3] sm:$0xff] %vm711, %v1111
      %1120 = vst.msk [vmem:[#allocation3 + $0x8] sm:$0xff] %vm711, %v1112
      %1121 = vst.msk [vmem:[#allocation3 + $0x10] sm:$0xff] %vm711, %v1113
      %1122 = vst.msk [vmem:[#allocation3 + $0x18] sm:$0xff] %vm711, %v1114
      %1123 = vst.msk [vmem:[#allocation3 + $0x20] sm:$0xff] %vm711, %v1115
      %1124 = vst.msk [vmem:[#allocation3 + $0x28] sm:$0xff] %vm711, %v1116
      %1125 = vst.msk [vmem:[#allocation3 + $0x30] sm:$0xff] %vm711, %v1117
      %1126 = vst.msk [vmem:[#allocation3 + $0x38] sm:$0xff] %vm711, %v1118
      %v1127 = vld [vmem:[%s631] sm:$0xf]
      %v1128 = vld [vmem:[%s631 + $0x8] sm:$0xf]
      %v1129 = vld [vmem:[%s631 + $0x10] sm:$0xf]
      %v1130 = vld [vmem:[%s631 + $0x18] sm:$0xf]
      %v1131 = vld [vmem:[%s631 + $0x20] sm:$0xf]
      %v1132 = vld [vmem:[%s631 + $0x28] sm:$0xf]
      %v1133 = vld [vmem:[%s631 + $0x30] sm:$0xf]
      %v1134 = vld [vmem:[%s631 + $0x38] sm:$0xf]
      %s1135 = scalar_lea.vmem %s4, 6
      %v1136 = vld [vmem:[%s1135] sm:$0x3]
      %v1145 = vunpack.c.l.b16 %v1127
      %v1146 = vunpack.c.l.b16 %v1128
      %v1147 = vunpack.c.l.b16 %v1129
      %v1148 = vunpack.c.l.b16 %v1130
      %v1149 = vunpack.c.l.b16 %v1131
      %v1150 = vunpack.c.l.b16 %v1132
      %v1151 = vunpack.c.l.b16 %v1133
      %v1152 = vunpack.c.l.b16 %v1134
      %v1153 = vpack.c.b16 %v1146, %v1145
      %v1154 = vpack.c.b16 %v1148, %v1147
      %v1155 = vpack.c.b16 %v1150, %v1149
      %v1156 = vpack.c.b16 %v1152, %v1151
      %v1158 = vsel %vm711, %v1153, 0
      %v1161 = vsel %vm711, %v1154, 0
      %v1164 = vsel %vm711, %v1155, 0
      %v1167 = vsel %vm711, %v1156, 0
      %v1170 = vsel %vm724, %v1136, 0
      %1172 = vmatpush.bf16.msra.mxu0 0
      %1173 = vmatpush.bf16.msra.mxu0 0
      %1174 = vmatpush.bf16.msra.mxu0 0
      %1175 = vmatpush.bf16.msra.mxu0 0
      %1176 = vmatpush.bf16.msra.mxu0 0
      %1177 = vmatpush.bf16.msra.mxu0 0
      %1178 = vmatpush.bf16.msra.mxu0 0
      %1179 = vmatpush.bf16.msra.mxu0 %v1170
      %1180 = vmatmul.bf16.gmra.mxu0 %v1158
      %v1181 = vpop.f32.mrf.mxu0
      %v1182 = vadd.f32 0.0, %v1181
      %v1183 = vpop.f32.mrf.mxu0
      %v1184 = vadd.f32 0.0, %v1183
      %1185 = vmatmul.bf16.gmra.mxu0 %v1161
      %v1186 = vpop.f32.mrf.mxu0
      %v1187 = vadd.f32 0.0, %v1186
      %v1188 = vpop.f32.mrf.mxu0
      %v1189 = vadd.f32 0.0, %v1188
      %1190 = vmatmul.bf16.gmra.mxu0 %v1164
      %v1191 = vpop.f32.mrf.mxu0
      %v1192 = vadd.f32 0.0, %v1191
      %v1193 = vpop.f32.mrf.mxu0
      %v1194 = vadd.f32 0.0, %v1193
      %1195 = vmatmul.bf16.gmra.mxu0 %v1167
      %v1196 = vpop.f32.mrf.mxu0
      %v1197 = vadd.f32 0.0, %v1196
      %v1198 = vpop.f32.mrf.mxu0
      %v1199 = vadd.f32 0.0, %v1198
      %1200 = vdwg.mxu0
      %v1201 = vld [vmem:[#allocation3] sm:$0xff]
      %v1202 = vld [vmem:[#allocation3 + $0x8] sm:$0xff]
      %v1203 = vld [vmem:[#allocation3 + $0x10] sm:$0xff]
      %v1204 = vld [vmem:[#allocation3 + $0x18] sm:$0xff]
      %v1205 = vld [vmem:[#allocation3 + $0x20] sm:$0xff]
      %v1206 = vld [vmem:[#allocation3 + $0x28] sm:$0xff]
      %v1207 = vld [vmem:[#allocation3 + $0x30] sm:$0xff]
      %v1208 = vld [vmem:[#allocation3 + $0x38] sm:$0xff]
      %v1209 = vadd.f32 %v1201, %v1182
      %v1210 = vadd.f32 %v1202, %v1184
      %v1211 = vadd.f32 %v1203, %v1187
      %v1212 = vadd.f32 %v1204, %v1189
      %v1213 = vadd.f32 %v1205, %v1192
      %v1214 = vadd.f32 %v1206, %v1194
      %v1215 = vadd.f32 %v1207, %v1197
      %v1216 = vadd.f32 %v1208, %v1199
      %1217 = vst.msk [vmem:[#allocation3] sm:$0xff] %vm711, %v1209
      %1218 = vst.msk [vmem:[#allocation3 + $0x8] sm:$0xff] %vm711, %v1210
      %1219 = vst.msk [vmem:[#allocation3 + $0x10] sm:$0xff] %vm711, %v1211
      %1220 = vst.msk [vmem:[#allocation3 + $0x18] sm:$0xff] %vm711, %v1212
      %1221 = vst.msk [vmem:[#allocation3 + $0x20] sm:$0xff] %vm711, %v1213
      %1222 = vst.msk [vmem:[#allocation3 + $0x28] sm:$0xff] %vm711, %v1214
      %1223 = vst.msk [vmem:[#allocation3 + $0x30] sm:$0xff] %vm711, %v1215
      %1224 = vst.msk [vmem:[#allocation3 + $0x38] sm:$0xff] %vm711, %v1216
      %v1225 = vld [vmem:[%s631] sm:$0xf]
      %v1226 = vld [vmem:[%s631 + $0x4] sm:$0x1]
      %v1227 = vld [vmem:[%s631 + $0x8] sm:$0xf]
      %v1228 = vld [vmem:[%s631 + $0xc] sm:$0x1]
      %v1229 = vld [vmem:[%s631 + $0x10] sm:$0xf]
      %v1230 = vld [vmem:[%s631 + $0x14] sm:$0x1]
      %v1231 = vld [vmem:[%s631 + $0x18] sm:$0xf]
      %v1232 = vld [vmem:[%s631 + $0x1c] sm:$0x1]
      %v1233 = vld [vmem:[%s631 + $0x20] sm:$0xf]
      %v1234 = vld [vmem:[%s631 + $0x24] sm:$0x1]
      %v1235 = vld [vmem:[%s631 + $0x28] sm:$0xf]
      %v1236 = vld [vmem:[%s631 + $0x2c] sm:$0x1]
      %v1237 = vld [vmem:[%s631 + $0x30] sm:$0xf]
      %v1238 = vld [vmem:[%s631 + $0x34] sm:$0x1]
      %v1239 = vld [vmem:[%s631 + $0x38] sm:$0xf]
      %v1240 = vld [vmem:[%s631 + $0x3c] sm:$0x1]
      %v1242 = vshrl.u32 %v1225, 16
      %v1244 = vrot.slane %v1242, 4
      %v1245 = vshll.u32 %v1225, 16
      %v1247 = vrot.slane %v1245, 5
      %v1248 = vor.u32 %v1244, %v1247
      %v1249 = vrot.slane %v1248, 4
      %v1251 = vshll.u32 %v1226, 16
      %v1253 = vrot.slane %v1251, 5
      %v1254 = vsel %vm783, %v1249, %v1253
      %v1256 = vshrl.u32 %v1227, 16
      %v1258 = vrot.slane %v1256, 4
      %v1259 = vshll.u32 %v1227, 16
      %v1261 = vrot.slane %v1259, 5
      %v1262 = vor.u32 %v1258, %v1261
      %v1263 = vrot.slane %v1262, 4
      %v1265 = vshll.u32 %v1228, 16
      %v1267 = vrot.slane %v1265, 5
      %v1268 = vsel %vm783, %v1263, %v1267
      %v1270 = vshrl.u32 %v1229, 16
      %v1272 = vrot.slane %v1270, 4
      %v1273 = vshll.u32 %v1229, 16
      %v1275 = vrot.slane %v1273, 5
      %v1276 = vor.u32 %v1272, %v1275
      %v1277 = vrot.slane %v1276, 4
      %v1279 = vshll.u32 %v1230, 16
      %v1281 = vrot.slane %v1279, 5
      %v1282 = vsel %vm783, %v1277, %v1281
      %v1284 = vshrl.u32 %v1231, 16
      %v1286 = vrot.slane %v1284, 4
      %v1287 = vshll.u32 %v1231, 16
      %v1289 = vrot.slane %v1287, 5
      %v1290 = vor.u32 %v1286, %v1289
      %v1291 = vrot.slane %v1290, 4
      %v1293 = vshll.u32 %v1232, 16
      %v1295 = vrot.slane %v1293, 5
      %v1296 = vsel %vm783, %v1291, %v1295
      %v1298 = vshrl.u32 %v1233, 16
      %v1300 = vrot.slane %v1298, 4
      %v1301 = vshll.u32 %v1233, 16
      %v1303 = vrot.slane %v1301, 5
      %v1304 = vor.u32 %v1300, %v1303
      %v1305 = vrot.slane %v1304, 4
      %v1307 = vshll.u32 %v1234, 16
      %v1309 = vrot.slane %v1307, 5
      %v1310 = vsel %vm783, %v1305, %v1309
      %v1312 = vshrl.u32 %v1235, 16
      %v1314 = vrot.slane %v1312, 4
      %v1315 = vshll.u32 %v1235, 16
      %v1317 = vrot.slane %v1315, 5
      %v1318 = vor.u32 %v1314, %v1317
      %v1319 = vrot.slane %v1318, 4
      %v1321 = vshll.u32 %v1236, 16
      %v1323 = vrot.slane %v1321, 5
      %v1324 = vsel %vm783, %v1319, %v1323
      %v1326 = vshrl.u32 %v1237, 16
      %v1328 = vrot.slane %v1326, 4
      %v1329 = vshll.u32 %v1237, 16
      %v1331 = vrot.slane %v1329, 5
      %v1332 = vor.u32 %v1328, %v1331
      %v1333 = vrot.slane %v1332, 4
      %v1335 = vshll.u32 %v1238, 16
      %v1337 = vrot.slane %v1335, 5
      %v1338 = vsel %vm783, %v1333, %v1337
      %v1340 = vshrl.u32 %v1239, 16
      %v1342 = vrot.slane %v1340, 4
      %v1343 = vshll.u32 %v1239, 16
      %v1345 = vrot.slane %v1343, 5
      %v1346 = vor.u32 %v1342, %v1345
      %v1347 = vrot.slane %v1346, 4
      %v1349 = vshll.u32 %v1240, 16
      %v1351 = vrot.slane %v1349, 5
      %v1352 = vsel %vm783, %v1347, %v1351
      %s1353 = scalar_lea.vmem %s4, 8
      %v1354 = vld [vmem:[%s1353] sm:$0x3]
      %v1355 = vunpack.c.l.b16 %v1254
      %v1356 = vunpack.c.l.b16 %v1268
      %v1357 = vunpack.c.l.b16 %v1282
      %v1358 = vunpack.c.l.b16 %v1296
      %v1359 = vunpack.c.l.b16 %v1310
      %v1360 = vunpack.c.l.b16 %v1324
      %v1361 = vunpack.c.l.b16 %v1338
      %v1362 = vunpack.c.l.b16 %v1352
      %v1363 = vpack.c.b16 %v1356, %v1355
      %v1364 = vpack.c.b16 %v1358, %v1357
      %v1365 = vpack.c.b16 %v1360, %v1359
      %v1366 = vpack.c.b16 %v1362, %v1361
      %v1368 = vsel %vm711, %v1363, 0
      %v1371 = vsel %vm711, %v1364, 0
      %v1374 = vsel %vm711, %v1365, 0
      %v1377 = vsel %vm711, %v1366, 0
      %v1380 = vsel %vm724, %v1354, 0
      %1382 = vmatpush.bf16.msra.mxu0 0
      %1383 = vmatpush.bf16.msra.mxu0 0
      %1384 = vmatpush.bf16.msra.mxu0 0
      %1385 = vmatpush.bf16.msra.mxu0 0
      %1386 = vmatpush.bf16.msra.mxu0 0
      %1387 = vmatpush.bf16.msra.mxu0 0
      %1388 = vmatpush.bf16.msra.mxu0 0
      %1389 = vmatpush.bf16.msra.mxu0 %v1380
      %1390 = vmatmul.bf16.gmra.mxu0 %v1368
      %v1391 = vpop.f32.mrf.mxu0
      %v1392 = vadd.f32 0.0, %v1391
      %v1393 = vpop.f32.mrf.mxu0
      %v1394 = vadd.f32 0.0, %v1393
      %1395 = vmatmul.bf16.gmra.mxu0 %v1371
      %v1396 = vpop.f32.mrf.mxu0
      %v1397 = vadd.f32 0.0, %v1396
      %v1398 = vpop.f32.mrf.mxu0
      %v1399 = vadd.f32 0.0, %v1398
      %1400 = vmatmul.bf16.gmra.mxu0 %v1374
      %v1401 = vpop.f32.mrf.mxu0
      %v1402 = vadd.f32 0.0, %v1401
      %v1403 = vpop.f32.mrf.mxu0
      %v1404 = vadd.f32 0.0, %v1403
      %1405 = vmatmul.bf16.gmra.mxu0 %v1377
      %v1406 = vpop.f32.mrf.mxu0
      %v1407 = vadd.f32 0.0, %v1406
      %v1408 = vpop.f32.mrf.mxu0
      %v1409 = vadd.f32 0.0, %v1408
      %1410 = vdwg.mxu0
      %v1411 = vld [vmem:[#allocation3] sm:$0xff]
      %v1412 = vld [vmem:[#allocation3 + $0x8] sm:$0xff]
      %v1413 = vld [vmem:[#allocation3 + $0x10] sm:$0xff]
      %v1414 = vld [vmem:[#allocation3 + $0x18] sm:$0xff]
      %v1415 = vld [vmem:[#allocation3 + $0x20] sm:$0xff]
      %v1416 = vld [vmem:[#allocation3 + $0x28] sm:$0xff]
      %v1417 = vld [vmem:[#allocation3 + $0x30] sm:$0xff]
      %v1418 = vld [vmem:[#allocation3 + $0x38] sm:$0xff]
      %v1419 = vadd.f32 %v1411, %v1392
      %v1420 = vadd.f32 %v1412, %v1394
      %v1421 = vadd.f32 %v1413, %v1397
      %v1422 = vadd.f32 %v1414, %v1399
      %v1423 = vadd.f32 %v1415, %v1402
      %v1424 = vadd.f32 %v1416, %v1404
      %v1425 = vadd.f32 %v1417, %v1407
      %v1426 = vadd.f32 %v1418, %v1409
      %1427 = vst.msk [vmem:[#allocation3] sm:$0xff] %vm711, %v1419
      %1428 = vst.msk [vmem:[#allocation3 + $0x8] sm:$0xff] %vm711, %v1420
      %1429 = vst.msk [vmem:[#allocation3 + $0x10] sm:$0xff] %vm711, %v1421
      %1430 = vst.msk [vmem:[#allocation3 + $0x18] sm:$0xff] %vm711, %v1422
      %1431 = vst.msk [vmem:[#allocation3 + $0x20] sm:$0xff] %vm711, %v1423
      %1432 = vst.msk [vmem:[#allocation3 + $0x28] sm:$0xff] %vm711, %v1424
      %1433 = vst.msk [vmem:[#allocation3 + $0x30] sm:$0xff] %vm711, %v1425
      %1434 = vst.msk [vmem:[#allocation3 + $0x38] sm:$0xff] %vm711, %v1426
      %v1435 = vld [vmem:[%s631] sm:$0xe]
      %v1436 = vld [vmem:[%s631 + $0x4] sm:$0x1]
      %v1437 = vld [vmem:[%s631 + $0x8] sm:$0xe]
      %v1438 = vld [vmem:[%s631 + $0xc] sm:$0x1]
      %v1439 = vld [vmem:[%s631 + $0x10] sm:$0xe]
      %v1440 = vld [vmem:[%s631 + $0x14] sm:$0x1]
      %v1441 = vld [vmem:[%s631 + $0x18] sm:$0xe]
      %v1442 = vld [vmem:[%s631 + $0x1c] sm:$0x1]
      %v1443 = vld [vmem:[%s631 + $0x20] sm:$0xe]
      %v1444 = vld [vmem:[%s631 + $0x24] sm:$0x1]
      %v1445 = vld [vmem:[%s631 + $0x28] sm:$0xe]
      %v1446 = vld [vmem:[%s631 + $0x2c] sm:$0x1]
      %v1447 = vld [vmem:[%s631 + $0x30] sm:$0xe]
      %v1448 = vld [vmem:[%s631 + $0x34] sm:$0x1]
      %v1449 = vld [vmem:[%s631 + $0x38] sm:$0xe]
      %v1450 = vld [vmem:[%s631 + $0x3c] sm:$0x1]
      %v1467 = vrot.slane %v1435, 5
      %v1468 = vrot.slane %v1467, 4
      %v1469 = vrot.slane %v1436, 5
      %v1470 = vsel %vm1012, %v1468, %v1469
      %v1471 = vrot.slane %v1437, 5
      %v1472 = vrot.slane %v1471, 4
      %v1473 = vrot.slane %v1438, 5
      %v1474 = vsel %vm1012, %v1472, %v1473
      %v1475 = vrot.slane %v1439, 5
      %v1476 = vrot.slane %v1475, 4
      %v1477 = vrot.slane %v1440, 5
      %v1478 = vsel %vm1012, %v1476, %v1477
      %v1479 = vrot.slane %v1441, 5
      %v1480 = vrot.slane %v1479, 4
      %v1481 = vrot.slane %v1442, 5
      %v1482 = vsel %vm1012, %v1480, %v1481
      %v1483 = vrot.slane %v1443, 5
      %v1484 = vrot.slane %v1483, 4
      %v1485 = vrot.slane %v1444, 5
      %v1486 = vsel %vm1012, %v1484, %v1485
      %v1487 = vrot.slane %v1445, 5
      %v1488 = vrot.slane %v1487, 4
      %v1489 = vrot.slane %v1446, 5
      %v1490 = vsel %vm1012, %v1488, %v1489
      %v1491 = vrot.slane %v1447, 5
      %v1492 = vrot.slane %v1491, 4
      %v1493 = vrot.slane %v1448, 5
      %v1494 = vsel %vm1012, %v1492, %v1493
      %v1495 = vrot.slane %v1449, 5
      %v1496 = vrot.slane %v1495, 4
      %v1497 = vrot.slane %v1450, 5
      %v1498 = vsel %vm1012, %v1496, %v1497
      %s1499 = scalar_lea.vmem %s4, 10
      %v1500 = vld [vmem:[%s1499] sm:$0x3]
      %v1501 = vunpack.c.l.b16 %v1470
      %v1502 = vunpack.c.l.b16 %v1474
      %v1503 = vunpack.c.l.b16 %v1478
      %v1504 = vunpack.c.l.b16 %v1482
      %v1505 = vunpack.c.l.b16 %v1486
      %v1506 = vunpack.c.l.b16 %v1490
      %v1507 = vunpack.c.l.b16 %v1494
      %v1508 = vunpack.c.l.b16 %v1498
      %v1509 = vpack.c.b16 %v1502, %v1501
      %v1510 = vpack.c.b16 %v1504, %v1503
      %v1511 = vpack.c.b16 %v1506, %v1505
      %v1512 = vpack.c.b16 %v1508, %v1507
      %v1514 = vsel %vm711, %v1509, 0
      %v1517 = vsel %vm711, %v1510, 0
      %v1520 = vsel %vm711, %v1511, 0
      %v1523 = vsel %vm711, %v1512, 0
      %v1526 = vsel %vm724, %v1500, 0
      %1528 = vmatpush.bf16.msra.mxu0 0
      %1529 = vmatpush.bf16.msra.mxu0 0
      %1530 = vmatpush.bf16.msra.mxu0 0
      %1531 = vmatpush.bf16.msra.mxu0 0
      %1532 = vmatpush.bf16.msra.mxu0 0
      %1533 = vmatpush.bf16.msra.mxu0 0
      %1534 = vmatpush.bf16.msra.mxu0 0
      %1535 = vmatpush.bf16.msra.mxu0 %v1526
      %1536 = vmatmul.bf16.gmra.mxu0 %v1514
      %v1537 = vpop.f32.mrf.mxu0
      %v1538 = vadd.f32 0.0, %v1537
      %v1539 = vpop.f32.mrf.mxu0
      %v1540 = vadd.f32 0.0, %v1539
      %1541 = vmatmul.bf16.gmra.mxu0 %v1517
      %v1542 = vpop.f32.mrf.mxu0
      %v1543 = vadd.f32 0.0, %v1542
      %v1544 = vpop.f32.mrf.mxu0
      %v1545 = vadd.f32 0.0, %v1544
      %1546 = vmatmul.bf16.gmra.mxu0 %v1520
      %v1547 = vpop.f32.mrf.mxu0
      %v1548 = vadd.f32 0.0, %v1547
      %v1549 = vpop.f32.mrf.mxu0
      %v1550 = vadd.f32 0.0, %v1549
      %1551 = vmatmul.bf16.gmra.mxu0 %v1523
      %v1552 = vpop.f32.mrf.mxu0
      %v1553 = vadd.f32 0.0, %v1552
      %v1554 = vpop.f32.mrf.mxu0
      %v1555 = vadd.f32 0.0, %v1554
      %1556 = vdwg.mxu0
      %v1557 = vld [vmem:[#allocation3] sm:$0xff]
      %v1558 = vld [vmem:[#allocation3 + $0x8] sm:$0xff]
      %v1559 = vld [vmem:[#allocation3 + $0x10] sm:$0xff]
      %v1560 = vld [vmem:[#allocation3 + $0x18] sm:$0xff]
      %v1561 = vld [vmem:[#allocation3 + $0x20] sm:$0xff]
      %v1562 = vld [vmem:[#allocation3 + $0x28] sm:$0xff]
      %v1563 = vld [vmem:[#allocation3 + $0x30] sm:$0xff]
      %v1564 = vld [vmem:[#allocation3 + $0x38] sm:$0xff]
      %v1565 = vadd.f32 %v1557, %v1538
      %v1566 = vadd.f32 %v1558, %v1540
      %v1567 = vadd.f32 %v1559, %v1543
      %v1568 = vadd.f32 %v1560, %v1545
      %v1569 = vadd.f32 %v1561, %v1548
      %v1570 = vadd.f32 %v1562, %v1550
      %v1571 = vadd.f32 %v1563, %v1553
      %v1572 = vadd.f32 %v1564, %v1555
      %1573 = vst.msk [vmem:[#allocation3] sm:$0xff] %vm711, %v1565
      %1574 = vst.msk [vmem:[#allocation3 + $0x8] sm:$0xff] %vm711, %v1566
      %1575 = vst.msk [vmem:[#allocation3 + $0x10] sm:$0xff] %vm711, %v1567
      %1576 = vst.msk [vmem:[#allocation3 + $0x18] sm:$0xff] %vm711, %v1568
      %1577 = vst.msk [vmem:[#allocation3 + $0x20] sm:$0xff] %vm711, %v1569
      %1578 = vst.msk [vmem:[#allocation3 + $0x28] sm:$0xff] %vm711, %v1570
      %1579 = vst.msk [vmem:[#allocation3 + $0x30] sm:$0xff] %vm711, %v1571
      %1580 = vst.msk [vmem:[#allocation3 + $0x38] sm:$0xff] %vm711, %v1572
      %s1581 = scalar_lea.vmem [#allocation2], 16
      %v1582 = vld [vmem:[%s1581] sm:$0xf]
      %v1583 = vld [vmem:[%s1581 + $0x8] sm:$0xf]
      %v1584 = vld [vmem:[%s1581 + $0x10] sm:$0xf]
      %v1585 = vld [vmem:[%s1581 + $0x18] sm:$0xf]
      %v1586 = vld [vmem:[%s1581 + $0x20] sm:$0xf]
      %v1587 = vld [vmem:[%s1581 + $0x28] sm:$0xf]
      %v1588 = vld [vmem:[%s1581 + $0x30] sm:$0xf]
      %v1589 = vld [vmem:[%s1581 + $0x38] sm:$0xf]
      %s1590 = scalar_lea.vmem %s4, 12
      %v1591 = vld [vmem:[%s1590] sm:$0x3]
      %v1600 = vunpack.c.l.b16 %v1582
      %v1601 = vunpack.c.l.b16 %v1583
      %v1602 = vunpack.c.l.b16 %v1584
      %v1603 = vunpack.c.l.b16 %v1585
      %v1604 = vunpack.c.l.b16 %v1586
      %v1605 = vunpack.c.l.b16 %v1587
      %v1606 = vunpack.c.l.b16 %v1588
      %v1607 = vunpack.c.l.b16 %v1589
      %v1608 = vpack.c.b16 %v1601, %v1600
      %v1609 = vpack.c.b16 %v1603, %v1602
      %v1610 = vpack.c.b16 %v1605, %v1604
      %v1611 = vpack.c.b16 %v1607, %v1606
      %v1613 = vsel %vm711, %v1608, 0
      %v1616 = vsel %vm711, %v1609, 0
      %v1619 = vsel %vm711, %v1610, 0
      %v1622 = vsel %vm711, %v1611, 0
      %v1625 = vsel %vm724, %v1591, 0
      %1627 = vmatpush.bf16.msra.mxu0 0
      %1628 = vmatpush.bf16.msra.mxu0 0
      %1629 = vmatpush.bf16.msra.mxu0 0
      %1630 = vmatpush.bf16.msra.mxu0 0
      %1631 = vmatpush.bf16.msra.mxu0 0
      %1632 = vmatpush.bf16.msra.mxu0 0
      %1633 = vmatpush.bf16.msra.mxu0 0
      %1634 = vmatpush.bf16.msra.mxu0 %v1625
      %1635 = vmatmul.bf16.gmra.mxu0 %v1613
      %v1636 = vpop.f32.mrf.mxu0
      %v1637 = vadd.f32 0.0, %v1636
      %v1638 = vpop.f32.mrf.mxu0
      %v1639 = vadd.f32 0.0, %v1638
      %1640 = vmatmul.bf16.gmra.mxu0 %v1616
      %v1641 = vpop.f32.mrf.mxu0
      %v1642 = vadd.f32 0.0, %v1641
      %v1643 = vpop.f32.mrf.mxu0
      %v1644 = vadd.f32 0.0, %v1643
      %1645 = vmatmul.bf16.gmra.mxu0 %v1619
      %v1646 = vpop.f32.mrf.mxu0
      %v1647 = vadd.f32 0.0, %v1646
      %v1648 = vpop.f32.mrf.mxu0
      %v1649 = vadd.f32 0.0, %v1648
      %1650 = vmatmul.bf16.gmra.mxu0 %v1622
      %v1651 = vpop.f32.mrf.mxu0
      %v1652 = vadd.f32 0.0, %v1651
      %v1653 = vpop.f32.mrf.mxu0
      %v1654 = vadd.f32 0.0, %v1653
      %1655 = vdwg.mxu0
      %v1656 = vld [vmem:[#allocation3] sm:$0xff]
      %v1657 = vld [vmem:[#allocation3 + $0x8] sm:$0xff]
      %v1658 = vld [vmem:[#allocation3 + $0x10] sm:$0xff]
      %v1659 = vld [vmem:[#allocation3 + $0x18] sm:$0xff]
      %v1660 = vld [vmem:[#allocation3 + $0x20] sm:$0xff]
      %v1661 = vld [vmem:[#allocation3 + $0x28] sm:$0xff]
      %v1662 = vld [vmem:[#allocation3 + $0x30] sm:$0xff]
      %v1663 = vld [vmem:[#allocation3 + $0x38] sm:$0xff]
      %v1664 = vadd.f32 %v1656, %v1637
      %v1665 = vadd.f32 %v1657, %v1639
      %v1666 = vadd.f32 %v1658, %v1642
      %v1667 = vadd.f32 %v1659, %v1644
      %v1668 = vadd.f32 %v1660, %v1647
      %v1669 = vadd.f32 %v1661, %v1649
      %v1670 = vadd.f32 %v1662, %v1652
      %v1671 = vadd.f32 %v1663, %v1654
      %1672 = vst.msk [vmem:[#allocation3] sm:$0xff] %vm711, %v1664
      %1673 = vst.msk [vmem:[#allocation3 + $0x8] sm:$0xff] %vm711, %v1665
      %1674 = vst.msk [vmem:[#allocation3 + $0x10] sm:$0xff] %vm711, %v1666
      %1675 = vst.msk [vmem:[#allocation3 + $0x18] sm:$0xff] %vm711, %v1667
      %1676 = vst.msk [vmem:[#allocation3 + $0x20] sm:$0xff] %vm711, %v1668
      %1677 = vst.msk [vmem:[#allocation3 + $0x28] sm:$0xff] %vm711, %v1669
      %1678 = vst.msk [vmem:[#allocation3 + $0x30] sm:$0xff] %vm711, %v1670
      %1679 = vst.msk [vmem:[#allocation3 + $0x38] sm:$0xff] %vm711, %v1671
      %v1680 = vld [vmem:[%s1581] sm:$0xf]
      %v1681 = vld [vmem:[%s1581 + $0x4] sm:$0x1]
      %v1682 = vld [vmem:[%s1581 + $0x8] sm:$0xf]
      %v1683 = vld [vmem:[%s1581 + $0xc] sm:$0x1]
      %v1684 = vld [vmem:[%s1581 + $0x10] sm:$0xf]
      %v1685 = vld [vmem:[%s1581 + $0x14] sm:$0x1]
      %v1686 = vld [vmem:[%s1581 + $0x18] sm:$0xf]
      %v1687 = vld [vmem:[%s1581 + $0x1c] sm:$0x1]
      %v1688 = vld [vmem:[%s1581 + $0x20] sm:$0xf]
      %v1689 = vld [vmem:[%s1581 + $0x24] sm:$0x1]
      %v1690 = vld [vmem:[%s1581 + $0x28] sm:$0xf]
      %v1691 = vld [vmem:[%s1581 + $0x2c] sm:$0x1]
      %v1692 = vld [vmem:[%s1581 + $0x30] sm:$0xf]
      %v1693 = vld [vmem:[%s1581 + $0x34] sm:$0x1]
      %v1694 = vld [vmem:[%s1581 + $0x38] sm:$0xf]
      %v1695 = vld [vmem:[%s1581 + $0x3c] sm:$0x1]
      %v1697 = vshrl.u32 %v1680, 16
      %v1699 = vrot.slane %v1697, 4
      %v1700 = vshll.u32 %v1680, 16
      %v1702 = vrot.slane %v1700, 5
      %v1703 = vor.u32 %v1699, %v1702
      %v1704 = vrot.slane %v1703, 4
      %v1706 = vshll.u32 %v1681, 16
      %v1708 = vrot.slane %v1706, 5
      %v1709 = vsel %vm783, %v1704, %v1708
      %v1711 = vshrl.u32 %v1682, 16
      %v1713 = vrot.slane %v1711, 4
      %v1714 = vshll.u32 %v1682, 16
      %v1716 = vrot.slane %v1714, 5
      %v1717 = vor.u32 %v1713, %v1716
      %v1718 = vrot.slane %v1717, 4
      %v1720 = vshll.u32 %v1683, 16
      %v1722 = vrot.slane %v1720, 5
      %v1723 = vsel %vm783, %v1718, %v1722
      %v1725 = vshrl.u32 %v1684, 16
      %v1727 = vrot.slane %v1725, 4
      %v1728 = vshll.u32 %v1684, 16
      %v1730 = vrot.slane %v1728, 5
      %v1731 = vor.u32 %v1727, %v1730
      %v1732 = vrot.slane %v1731, 4
      %v1734 = vshll.u32 %v1685, 16
      %v1736 = vrot.slane %v1734, 5
      %v1737 = vsel %vm783, %v1732, %v1736
      %v1739 = vshrl.u32 %v1686, 16
      %v1741 = vrot.slane %v1739, 4
      %v1742 = vshll.u32 %v1686, 16
      %v1744 = vrot.slane %v1742, 5
      %v1745 = vor.u32 %v1741, %v1744
      %v1746 = vrot.slane %v1745, 4
      %v1748 = vshll.u32 %v1687, 16
      %v1750 = vrot.slane %v1748, 5
      %v1751 = vsel %vm783, %v1746, %v1750
      %v1753 = vshrl.u32 %v1688, 16
      %v1755 = vrot.slane %v1753, 4
      %v1756 = vshll.u32 %v1688, 16
      %v1758 = vrot.slane %v1756, 5
      %v1759 = vor.u32 %v1755, %v1758
      %v1760 = vrot.slane %v1759, 4
      %v1762 = vshll.u32 %v1689, 16
      %v1764 = vrot.slane %v1762, 5
      %v1765 = vsel %vm783, %v1760, %v1764
      %v1767 = vshrl.u32 %v1690, 16
      %v1769 = vrot.slane %v1767, 4
      %v1770 = vshll.u32 %v1690, 16
      %v1772 = vrot.slane %v1770, 5
      %v1773 = vor.u32 %v1769, %v1772
      %v1774 = vrot.slane %v1773, 4
      %v1776 = vshll.u32 %v1691, 16
      %v1778 = vrot.slane %v1776, 5
      %v1779 = vsel %vm783, %v1774, %v1778
      %v1781 = vshrl.u32 %v1692, 16
      %v1783 = vrot.slane %v1781, 4
      %v1784 = vshll.u32 %v1692, 16
      %v1786 = vrot.slane %v1784, 5
      %v1787 = vor.u32 %v1783, %v1786
      %v1788 = vrot.slane %v1787, 4
      %v1790 = vshll.u32 %v1693, 16
      %v1792 = vrot.slane %v1790, 5
      %v1793 = vsel %vm783, %v1788, %v1792
      %v1795 = vshrl.u32 %v1694, 16
      %v1797 = vrot.slane %v1795, 4
      %v1798 = vshll.u32 %v1694, 16
      %v1800 = vrot.slane %v1798, 5
      %v1801 = vor.u32 %v1797, %v1800
      %v1802 = vrot.slane %v1801, 4
      %v1804 = vshll.u32 %v1695, 16
      %v1806 = vrot.slane %v1804, 5
      %v1807 = vsel %vm783, %v1802, %v1806
      %s1808 = scalar_lea.vmem %s4, 14
      %v1809 = vld [vmem:[%s1808] sm:$0x3]
      %v1810 = vunpack.c.l.b16 %v1709
      %v1811 = vunpack.c.l.b16 %v1723
      %v1812 = vunpack.c.l.b16 %v1737
      %v1813 = vunpack.c.l.b16 %v1751
      %v1814 = vunpack.c.l.b16 %v1765
      %v1815 = vunpack.c.l.b16 %v1779
      %v1816 = vunpack.c.l.b16 %v1793
      %v1817 = vunpack.c.l.b16 %v1807
      %v1818 = vpack.c.b16 %v1811, %v1810
      %v1819 = vpack.c.b16 %v1813, %v1812
      %v1820 = vpack.c.b16 %v1815, %v1814
      %v1821 = vpack.c.b16 %v1817, %v1816
      %v1823 = vsel %vm711, %v1818, 0
      %v1826 = vsel %vm711, %v1819, 0
      %v1829 = vsel %vm711, %v1820, 0
      %v1832 = vsel %vm711, %v1821, 0
      %v1835 = vsel %vm724, %v1809, 0
      %1837 = vmatpush.bf16.msra.mxu0 0
      %1838 = vmatpush.bf16.msra.mxu0 0
      %1839 = vmatpush.bf16.msra.mxu0 0
      %1840 = vmatpush.bf16.msra.mxu0 0
      %1841 = vmatpush.bf16.msra.mxu0 0
      %1842 = vmatpush.bf16.msra.mxu0 0
      %1843 = vmatpush.bf16.msra.mxu0 0
      %1844 = vmatpush.bf16.msra.mxu0 %v1835
      %1845 = vmatmul.bf16.gmra.mxu0 %v1823
      %v1846 = vpop.f32.mrf.mxu0
      %v1847 = vadd.f32 0.0, %v1846
      %v1848 = vpop.f32.mrf.mxu0
      %v1849 = vadd.f32 0.0, %v1848
      %1850 = vmatmul.bf16.gmra.mxu0 %v1826
      %v1851 = vpop.f32.mrf.mxu0
      %v1852 = vadd.f32 0.0, %v1851
      %v1853 = vpop.f32.mrf.mxu0
      %v1854 = vadd.f32 0.0, %v1853
      %1855 = vmatmul.bf16.gmra.mxu0 %v1829
      %v1856 = vpop.f32.mrf.mxu0
      %v1857 = vadd.f32 0.0, %v1856
      %v1858 = vpop.f32.mrf.mxu0
      %v1859 = vadd.f32 0.0, %v1858
      %1860 = vmatmul.bf16.gmra.mxu0 %v1832
      %v1861 = vpop.f32.mrf.mxu0
      %v1862 = vadd.f32 0.0, %v1861
      %v1863 = vpop.f32.mrf.mxu0
      %v1864 = vadd.f32 0.0, %v1863
      %1865 = vdwg.mxu0
      %v1866 = vld [vmem:[#allocation3] sm:$0xff]
      %v1867 = vld [vmem:[#allocation3 + $0x8] sm:$0xff]
      %v1868 = vld [vmem:[#allocation3 + $0x10] sm:$0xff]
      %v1869 = vld [vmem:[#allocation3 + $0x18] sm:$0xff]
      %v1870 = vld [vmem:[#allocation3 + $0x20] sm:$0xff]
      %v1871 = vld [vmem:[#allocation3 + $0x28] sm:$0xff]
      %v1872 = vld [vmem:[#allocation3 + $0x30] sm:$0xff]
      %v1873 = vld [vmem:[#allocation3 + $0x38] sm:$0xff]
      %v1874 = vadd.f32 %v1866, %v1847
      %v1875 = vadd.f32 %v1867, %v1849
      %v1876 = vadd.f32 %v1868, %v1852
      %v1877 = vadd.f32 %v1869, %v1854
      %v1878 = vadd.f32 %v1870, %v1857
      %v1879 = vadd.f32 %v1871, %v1859
      %v1880 = vadd.f32 %v1872, %v1862
      %v1881 = vadd.f32 %v1873, %v1864
      %1882 = vst.msk [vmem:[#allocation3] sm:$0xff] %vm711, %v1874
      %1883 = vst.msk [vmem:[#allocation3 + $0x8] sm:$0xff] %vm711, %v1875
      %1884 = vst.msk [vmem:[#allocation3 + $0x10] sm:$0xff] %vm711, %v1876
      %1885 = vst.msk [vmem:[#allocation3 + $0x18] sm:$0xff] %vm711, %v1877
      %1886 = vst.msk [vmem:[#allocation3 + $0x20] sm:$0xff] %vm711, %v1878
      %1887 = vst.msk [vmem:[#allocation3 + $0x28] sm:$0xff] %vm711, %v1879
      %1888 = vst.msk [vmem:[#allocation3 + $0x30] sm:$0xff] %vm711, %v1880
      %1889 = vst.msk [vmem:[#allocation3 + $0x38] sm:$0xff] %vm711, %v1881
      %v1890 = vld [vmem:[%s1581] sm:$0xe]
      %v1891 = vld [vmem:[%s1581 + $0x4] sm:$0x1]
      %v1892 = vld [vmem:[%s1581 + $0x8] sm:$0xe]
      %v1893 = vld [vmem:[%s1581 + $0xc] sm:$0x1]
      %v1894 = vld [vmem:[%s1581 + $0x10] sm:$0xe]
      %v1895 = vld [vmem:[%s1581 + $0x14] sm:$0x1]
      %v1896 = vld [vmem:[%s1581 + $0x18] sm:$0xe]
      %v1897 = vld [vmem:[%s1581 + $0x1c] sm:$0x1]
      %v1898 = vld [vmem:[%s1581 + $0x20] sm:$0xe]
      %v1899 = vld [vmem:[%s1581 + $0x24] sm:$0x1]
      %v1900 = vld [vmem:[%s1581 + $0x28] sm:$0xe]
      %v1901 = vld [vmem:[%s1581 + $0x2c] sm:$0x1]
      %v1902 = vld [vmem:[%s1581 + $0x30] sm:$0xe]
      %v1903 = vld [vmem:[%s1581 + $0x34] sm:$0x1]
      %v1904 = vld [vmem:[%s1581 + $0x38] sm:$0xe]
      %v1905 = vld [vmem:[%s1581 + $0x3c] sm:$0x1]
      %v1922 = vrot.slane %v1890, 5
      %v1923 = vrot.slane %v1922, 4
      %v1924 = vrot.slane %v1891, 5
      %v1925 = vsel %vm1012, %v1923, %v1924
      %v1926 = vrot.slane %v1892, 5
      %v1927 = vrot.slane %v1926, 4
      %v1928 = vrot.slane %v1893, 5
      %v1929 = vsel %vm1012, %v1927, %v1928
      %v1930 = vrot.slane %v1894, 5
      %v1931 = vrot.slane %v1930, 4
      %v1932 = vrot.slane %v1895, 5
      %v1933 = vsel %vm1012, %v1931, %v1932
      %v1934 = vrot.slane %v1896, 5
      %v1935 = vrot.slane %v1934, 4
      %v1936 = vrot.slane %v1897, 5
      %v1937 = vsel %vm1012, %v1935, %v1936
      %v1938 = vrot.slane %v1898, 5
      %v1939 = vrot.slane %v1938, 4
      %v1940 = vrot.slane %v1899, 5
      %v1941 = vsel %vm1012, %v1939, %v1940
      %v1942 = vrot.slane %v1900, 5
      %v1943 = vrot.slane %v1942, 4
      %v1944 = vrot.slane %v1901, 5
      %v1945 = vsel %vm1012, %v1943, %v1944
      %v1946 = vrot.slane %v1902, 5
      %v1947 = vrot.slane %v1946, 4
      %v1948 = vrot.slane %v1903, 5
      %v1949 = vsel %vm1012, %v1947, %v1948
      %v1950 = vrot.slane %v1904, 5
      %v1951 = vrot.slane %v1950, 4
      %v1952 = vrot.slane %v1905, 5
      %v1953 = vsel %vm1012, %v1951, %v1952
      %s1954 = scalar_lea.vmem %s4, 16
      %v1955 = vld [vmem:[%s1954] sm:$0x3]
      %v1956 = vunpack.c.l.b16 %v1925
      %v1957 = vunpack.c.l.b16 %v1929
      %v1958 = vunpack.c.l.b16 %v1933
      %v1959 = vunpack.c.l.b16 %v1937
      %v1960 = vunpack.c.l.b16 %v1941
      %v1961 = vunpack.c.l.b16 %v1945
      %v1962 = vunpack.c.l.b16 %v1949
      %v1963 = vunpack.c.l.b16 %v1953
      %v1964 = vpack.c.b16 %v1957, %v1956
      %v1965 = vpack.c.b16 %v1959, %v1958
      %v1966 = vpack.c.b16 %v1961, %v1960
      %v1967 = vpack.c.b16 %v1963, %v1962
      %v1969 = vsel %vm711, %v1964, 0
      %v1972 = vsel %vm711, %v1965, 0
      %v1975 = vsel %vm711, %v1966, 0
      %v1978 = vsel %vm711, %v1967, 0
      %v1981 = vsel %vm724, %v1955, 0
      %1983 = vmatpush.bf16.msra.mxu0 0
      %1984 = vmatpush.bf16.msra.mxu0 0
      %1985 = vmatpush.bf16.msra.mxu0 0
      %1986 = vmatpush.bf16.msra.mxu0 0
      %1987 = vmatpush.bf16.msra.mxu0 0
      %1988 = vmatpush.bf16.msra.mxu0 0
      %1989 = vmatpush.bf16.msra.mxu0 0
      %1990 = vmatpush.bf16.msra.mxu0 %v1981
      %1991 = vmatmul.bf16.gmra.mxu0 %v1969
      %v1992 = vpop.f32.mrf.mxu0
      %v1993 = vadd.f32 0.0, %v1992
      %v1994 = vpop.f32.mrf.mxu0
      %v1995 = vadd.f32 0.0, %v1994
      %1996 = vmatmul.bf16.gmra.mxu0 %v1972
      %v1997 = vpop.f32.mrf.mxu0
      %v1998 = vadd.f32 0.0, %v1997
      %v1999 = vpop.f32.mrf.mxu0
      %v2000 = vadd.f32 0.0, %v1999
      %2001 = vmatmul.bf16.gmra.mxu0 %v1975
      %v2002 = vpop.f32.mrf.mxu0
      %v2003 = vadd.f32 0.0, %v2002
      %v2004 = vpop.f32.mrf.mxu0
      %v2005 = vadd.f32 0.0, %v2004
      %2006 = vmatmul.bf16.gmra.mxu0 %v1978
      %v2007 = vpop.f32.mrf.mxu0
      %v2008 = vadd.f32 0.0, %v2007
      %v2009 = vpop.f32.mrf.mxu0
      %v2010 = vadd.f32 0.0, %v2009
      %2011 = vdwg.mxu0
      %v2012 = vld [vmem:[#allocation3] sm:$0xff]
      %v2013 = vld [vmem:[#allocation3 + $0x8] sm:$0xff]
      %v2014 = vld [vmem:[#allocation3 + $0x10] sm:$0xff]
      %v2015 = vld [vmem:[#allocation3 + $0x18] sm:$0xff]
      %v2016 = vld [vmem:[#allocation3 + $0x20] sm:$0xff]
      %v2017 = vld [vmem:[#allocation3 + $0x28] sm:$0xff]
      %v2018 = vld [vmem:[#allocation3 + $0x30] sm:$0xff]
      %v2019 = vld [vmem:[#allocation3 + $0x38] sm:$0xff]
      %v2020 = vadd.f32 %v2012, %v1993
      %v2021 = vadd.f32 %v2013, %v1995
      %v2022 = vadd.f32 %v2014, %v1998
      %v2023 = vadd.f32 %v2015, %v2000
      %v2024 = vadd.f32 %v2016, %v2003
      %v2025 = vadd.f32 %v2017, %v2005
      %v2026 = vadd.f32 %v2018, %v2008
      %v2027 = vadd.f32 %v2019, %v2010
      %2028 = vst.msk [vmem:[#allocation3] sm:$0xff] %vm711, %v2020
      %2029 = vst.msk [vmem:[#allocation3 + $0x8] sm:$0xff] %vm711, %v2021
      %2030 = vst.msk [vmem:[#allocation3 + $0x10] sm:$0xff] %vm711, %v2022
      %2031 = vst.msk [vmem:[#allocation3 + $0x18] sm:$0xff] %vm711, %v2023
      %2032 = vst.msk [vmem:[#allocation3 + $0x20] sm:$0xff] %vm711, %v2024
      %2033 = vst.msk [vmem:[#allocation3 + $0x28] sm:$0xff] %vm711, %v2025
      %2034 = vst.msk [vmem:[#allocation3 + $0x30] sm:$0xff] %vm711, %v2026
      %2035 = vst.msk [vmem:[#allocation3 + $0x38] sm:$0xff] %vm711, %v2027
      %v2036 = vld [vmem:[#allocation3] sm:$0xff]
      %v2037 = vld [vmem:[#allocation3 + $0x8] sm:$0xff]
      %v2038 = vld [vmem:[#allocation3 + $0x10] sm:$0xff]
      %v2039 = vld [vmem:[#allocation3 + $0x18] sm:$0xff]
      %v2040 = vld [vmem:[#allocation3 + $0x20] sm:$0xff]
      %v2041 = vld [vmem:[#allocation3 + $0x28] sm:$0xff]
      %v2042 = vld [vmem:[#allocation3 + $0x30] sm:$0xff]
      %v2043 = vld [vmem:[#allocation3 + $0x38] sm:$0xff]
      %v2044 = vld [vmem:[%s5] sm:$0x1]
      %v2046 = vperm.slane %v2044, 0
      %v2048 = vmul.f32 %v2036, %v2046
      %v2049 = vmul.f32 %v2037, %v2046
      %v2050 = vmul.f32 %v2038, %v2046
      %v2051 = vmul.f32 %v2039, %v2046
      %v2052 = vmul.f32 %v2040, %v2046
      %v2053 = vmul.f32 %v2041, %v2046
      %v2054 = vmul.f32 %v2042, %v2046
      %v2055 = vmul.f32 %v2043, %v2046
      %v2056 = vld [vmem:[%s6] sm:$0x1]
      %v2058 = vperm.slane %v2056, 0
      %v2060 = vadd.f32 %v2048, %v2058
      %v2061 = vadd.f32 %v2049, %v2058
      %v2062 = vadd.f32 %v2050, %v2058
      %v2063 = vadd.f32 %v2051, %v2058
      %v2064 = vadd.f32 %v2052, %v2058
      %v2065 = vadd.f32 %v2053, %v2058
      %v2066 = vadd.f32 %v2054, %v2058
      %v2067 = vadd.f32 %v2055, %v2058
      %v2068 = vmax.f32 %v2060, 0.0
      %v2069 = vmax.f32 %v2061, 0.0
      %v2070 = vmax.f32 %v2062, 0.0
      %v2071 = vmax.f32 %v2063, 0.0
      %v2072 = vmax.f32 %v2064, 0.0
      %v2073 = vmax.f32 %v2065, 0.0
      %v2074 = vmax.f32 %v2066, 0.0
      %v2075 = vmax.f32 %v2067, 0.0
      %v2076 = vpack.c.bf16 %v2069, %v2068
      %v2077 = vpack.c.bf16 %v2071, %v2070
      %v2078 = vpack.c.bf16 %v2073, %v2072
      %v2079 = vpack.c.bf16 %v2075, %v2074
      %v2080 = vld [vmem:[%s7] sm:$0x3]
      %v2082 = vsel %vm711, %v2076, 0
      %v2085 = vsel %vm711, %v2077, 0
      %v2088 = vsel %vm711, %v2078, 0
      %v2091 = vsel %vm711, %v2079, 0
      %v2094 = vsel %vm724, %v2080, 0
      %2096 = vmatpush.bf16.msra.mxu0 0
      %2097 = vmatpush.bf16.msra.mxu0 0
      %2098 = vmatpush.bf16.msra.mxu0 0
      %2099 = vmatpush.bf16.msra.mxu0 0
      %2100 = vmatpush.bf16.msra.mxu0 0
      %2101 = vmatpush.bf16.msra.mxu0 0
      %2102 = vmatpush.bf16.msra.mxu0 0
      %2103 = vmatpush.bf16.msra.mxu0 %v2094
      %2104 = vmatmul.bf16.gmra.mxu0 %v2082
      %v2105 = vpop.f32.mrf.mxu0
      %v2106 = vadd.f32 0.0, %v2105
      %v2107 = vpop.f32.mrf.mxu0
      %v2108 = vadd.f32 0.0, %v2107
      %2109 = vmatmul.bf16.gmra.mxu0 %v2085
      %v2110 = vpop.f32.mrf.mxu0
      %v2111 = vadd.f32 0.0, %v2110
      %v2112 = vpop.f32.mrf.mxu0
      %v2113 = vadd.f32 0.0, %v2112
      %2114 = vmatmul.bf16.gmra.mxu0 %v2088
      %v2115 = vpop.f32.mrf.mxu0
      %v2116 = vadd.f32 0.0, %v2115
      %v2117 = vpop.f32.mrf.mxu0
      %v2118 = vadd.f32 0.0, %v2117
      %2119 = vmatmul.bf16.gmra.mxu0 %v2091
      %v2120 = vpop.f32.mrf.mxu0
      %v2121 = vadd.f32 0.0, %v2120
      %v2122 = vpop.f32.mrf.mxu0
      %v2123 = vadd.f32 0.0, %v2122
      %2124 = vdwg.mxu0
      %v2125 = vld [vmem:[%s8] sm:$0x1]
      %v2127 = vperm.slane %v2125, 0
      %v2129 = vmul.f32 %v2106, %v2127
      %v2130 = vmul.f32 %v2108, %v2127
      %v2131 = vmul.f32 %v2111, %v2127
      %v2132 = vmul.f32 %v2113, %v2127
      %v2133 = vmul.f32 %v2116, %v2127
      %v2134 = vmul.f32 %v2118, %v2127
      %v2135 = vmul.f32 %v2121, %v2127
      %v2136 = vmul.f32 %v2123, %v2127
      %v2137 = vld [vmem:[%s9] sm:$0x1]
      %v2139 = vperm.slane %v2137, 0
      %v2141 = vadd.f32 %v2129, %v2139
      %v2142 = vadd.f32 %v2130, %v2139
      %v2143 = vadd.f32 %v2131, %v2139
      %v2144 = vadd.f32 %v2132, %v2139
      %v2145 = vadd.f32 %v2133, %v2139
      %v2146 = vadd.f32 %v2134, %v2139
      %v2147 = vadd.f32 %v2135, %v2139
      %v2148 = vadd.f32 %v2136, %v2139
      %v2149 = vunpack.c.l.bf16 %v433
      %v2150 = vunpack.c.l.bf16 %v434
      %v2151 = vunpack.c.l.bf16 %v435
      %v2152 = vunpack.c.l.bf16 %v436
      %v2153 = vunpack.c.l.bf16 %v437
      %v2154 = vunpack.c.l.bf16 %v438
      %v2155 = vunpack.c.l.bf16 %v439
      %v2156 = vunpack.c.l.bf16 %v440
      %v2157 = vadd.f32 %v2141, %v2149
      %v2158 = vadd.f32 %v2142, %v2150
      %v2159 = vadd.f32 %v2143, %v2151
      %v2160 = vadd.f32 %v2144, %v2152
      %v2161 = vadd.f32 %v2145, %v2153
      %v2162 = vadd.f32 %v2146, %v2154
      %v2163 = vadd.f32 %v2147, %v2155
      %v2164 = vadd.f32 %v2148, %v2156
      %v2165 = vmax.f32 %v2157, 0.0
      %v2166 = vmax.f32 %v2158, 0.0
      %v2167 = vmax.f32 %v2159, 0.0
      %v2168 = vmax.f32 %v2160, 0.0
      %v2169 = vmax.f32 %v2161, 0.0
      %v2170 = vmax.f32 %v2162, 0.0
      %v2171 = vmax.f32 %v2163, 0.0
      %v2172 = vmax.f32 %v2164, 0.0
      %v2173 = vpack.c.bf16 %v2165, %v2165
      %v2174 = vpack.c.bf16 %v2166, %v2166
      %v2175 = vpack.c.bf16 %v2167, %v2167
      %v2176 = vpack.c.bf16 %v2168, %v2168
      %v2177 = vpack.c.bf16 %v2169, %v2169
      %v2178 = vpack.c.bf16 %v2170, %v2170
      %v2179 = vpack.c.bf16 %v2171, %v2171
      %v2180 = vpack.c.bf16 %v2172, %v2172
      %vm2181 = vcmask 125952
      %2182 = vst.msk [vmem:[%s359] sm:$0xf] %vm2181, %v2173
      %2183 = vst.msk [vmem:[%s359 + $0x4] sm:$0xf] %vm2181, %v2174
      %2184 = vst.msk [vmem:[%s359 + $0x8] sm:$0xf] %vm2181, %v2175
      %2185 = vst.msk [vmem:[%s359 + $0xc] sm:$0xf] %vm2181, %v2176
      %2186 = vst.msk [vmem:[%s359 + $0x10] sm:$0xf] %vm2181, %v2177
      %2187 = vst.msk [vmem:[%s359 + $0x14] sm:$0xf] %vm2181, %v2178
      %2188 = vst.msk [vmem:[%s359 + $0x18] sm:$0xf] %vm2181, %v2179
      %2189 = vst.msk [vmem:[%s359 + $0x1c] sm:$0xf] %vm2181, %v2180
      %p2190 = scmp.lt.s32.totalorder %s21, 1
      %s2191 = scalar_select %p2190, %s21, 1
      %s2192 = smul.addr %s2191, 8
      %s2193 = smul.addr %s2192, 4
      %s2194 = scalar_lea.vmem %s10, %s2193
      // Predicated region
      $region61: #{tpu_custom_call.1} parent=59 // pred_check
        %p2195 = pneg %p254
      $region62: #{tpu_custom_call.1} parent=59 // pred_check_branch
        %2197 = sbr.rel (%p2195) target = $region64
      $region63: #{tpu_custom_call.1} parent=59 // pred_region
        _
      $region64: #{tpu_custom_call.1} parent=59 // pred_fallthru
        _
    $region60: #{tpu_custom_call.1} parent=5 // pred_fallthru
      _
    %p2198 = scmp.le.s32.totalorder 2, %s16
    // Predicated region
    $region65: #{tpu_custom_call.1} parent=5 // pred_check
      %p2199 = pneg %p2198
    $region66: #{tpu_custom_call.1} parent=5 // pred_check_branch
      %2201 = sbr.rel (%p2199) target = $region68
    $region67: #{tpu_custom_call.1} parent=5 // pred_region
      %s2202 = ssub.s32 %s16, 2
      // Predicated region
      $region69: #{tpu_custom_call.1} parent=67 // pred_check
        %p2203 = pneg %p260
      $region70: #{tpu_custom_call.1} parent=67 // pred_check_branch
        %2205 = sbr.rel (%p2203) target = $region72
      $region71: #{tpu_custom_call.1} parent=67 // pred_region
        %p2206 = scmp.lt.s32.totalorder %s22, 1
        %s2207 = scalar_select %p2206, %s22, 1
        %s2208 = smul.addr %s2207, 8
        %s2209 = smul.addr %s2208, 4
        %s2210 = scalar_lea.vmem %s10, %s2209
      $region72: #{tpu_custom_call.1} parent=67 // pred_fallthru
        _
    $region68: #{tpu_custom_call.1} parent=5 // pred_fallthru
      _
  $region6: #{tpu_custom_call.1} parent=0 // loop_footer
    %s20 = sadd.s32 1, %s16
  $region7: #{tpu_custom_call.1} parent=0 // loop_footer_branch
    %15 = sbr.rel target = $region3
  $region8: #{tpu_custom_call.1} parent=0 // loop_exit
    _

</llo_original>
